<compile_context>
chip_gen: v7x
topology: tpu7x:2x2x1
jax: 0.10.0
libtpu: 0.0.40
codegen_flags: <defaults>
</compile_context>

<pallas_src>
import functools

import jax
import jax.numpy as jnp
from jax import lax
from jax.experimental import pallas as pl
from jax.experimental.pallas import tpu as pltpu


def _vmem_limit_bytes():
    # v5e/v6e have 128 MiB physical VMEM (raise above the 32 MiB scoped default);
    # v7x has 64 MiB (stay well below it). Fall back to a safe 32 MiB.
    try:
        cap = int(pltpu.get_tpu_info().vmem_capacity_bytes)
        return max(32 * 1024 * 1024, min((cap * 3) // 4, 96 * 1024 * 1024))
    except Exception:
        return 32 * 1024 * 1024


# ---------------------------------------------------------------------------
# Kernel A: packed 1x1 convs (t/p/g, attn scale pre-folded into t) + softmax
# attention + per-batch Gram moments of y for the BatchNorm statistics.
#   grid = (B, n_pad // tq); x (C, N) stays VMEM-resident across the q tiles.
# ---------------------------------------------------------------------------
def _attn_stats_kernel(x_ref, w_ref, b_ref, y_ref, gram_ref, s_ref,
                       t_s, p_s, g_s, *, rd, tq, n_valid, n_pad):
    q = pl.program_id(1)

    @pl.when(q == 0)
    def _():
        # One packed projection for t/p/g: x^T @ [w_t*scale | w_p | w_g]
        # (x is in its native (C, N) layout -> transposed-LHS matmul, once per batch).
        tpg = lax.dot_general(x_ref[...], w_ref[...], (((0,), (0,)), ((), ())),
                              preferred_element_type=jnp.float32) + b_ref[...]  # (N, 3*rd)
        t_s[...] = tpg[:, 0:rd]
        p_s[...] = tpg[:, rd:2 * rd]
        g_s[...] = tpg[:, 2 * rd:3 * rd]
        gram_ref[...] = jnp.zeros_like(gram_ref)
        s_ref[...] = jnp.zeros_like(s_ref)

    start = pl.multiple_of(q * tq, tq)
    theta = t_s[pl.ds(start, tq), :]                                   # (tq, rd)

    # scores = theta @ phi^T  (attn scale already folded into theta).
    scores = lax.dot_general(theta, p_s[...], (((1,), (1,)), ((), ())),
                             preferred_element_type=jnp.float32)       # (tq, n_pad)
    if n_pad != n_valid:
        kmask = lax.broadcasted_iota(jnp.int32, (1, n_pad), 1) < n_valid
        scores = jnp.where(kmask, scores, -1e30)                       # mask padded keys

    m = jnp.max(scores, axis=-1, keepdims=True)
    e = jnp.exp(scores - m)                                            # (tq, n_pad)
    denom = jnp.sum(e, axis=-1, keepdims=True)                         # (tq, 1), >= 1

    # Deferred normalization: scale the narrow (tq, rd) result, not the score tile.
    y = jnp.dot(e, g_s[...], preferred_element_type=jnp.float32)       # (tq, rd)
    y = y * pl.reciprocal(denom, approx=False)
    if n_pad != n_valid:
        pmask = (start + lax.broadcasted_iota(jnp.int32, (tq, 1), 0)) < n_valid
        y = y * pmask.astype(jnp.float32)                              # zero padded queries

    y_ref[...] = y.astype(y_ref.dtype)

    # Gram moments of y (tiny rd x rd / 1 x rd accumulators) -> BN stats of z(y)
    # are reconstructed in the wrapper; the z-conv itself is not re-done here.
    gram_ref[...] += lax.dot_general(y, y, (((0,), (0,)), ((), ())),
                                     preferred_element_type=jnp.float32)   # (rd, rd)
    s_ref[...] += jnp.sum(y, axis=0, keepdims=True)                        # (1, rd)


# ---------------------------------------------------------------------------
# Kernel B: z-conv with BN folded into the weights + residual add.
# Streaming, NCHW-native lane-dense output blocks (C, tqb).
# ---------------------------------------------------------------------------
def _z_bn_residual_kernel(y_ref, x_ref, wzt_ref, bzt_ref, out_ref):
    zt = lax.dot_general(wzt_ref[...], y_ref[...], (((1,), (1,)), ((), ())),
                         preferred_element_type=jnp.float32)           # (C, tqb)
    out_ref[...] = (zt + bzt_ref[...] + x_ref[...].astype(jnp.float32)
                    ).astype(out_ref.dtype)


# ---------------------------------------------------------------------------
# Wrapper
# ---------------------------------------------------------------------------
def non_local_attn(x_nchw, params, *, eps=1e-5, tq=128):
    B, C, H, W = x_nchw.shape
    N = H * W
    rd = params["w_t"].shape[1]
    scale = float(params["scale"])

    tq = max(128, (tq // 128) * 128)         # query tile must be a multiple of 128
    n_q = pl.cdiv(N, tq)
    n_pad = n_q * tq

    # Keep the activation in its native NCHW layout: (B, C, N). No transposes.
    x_bcn = x_nchw.reshape(B, C, N)
    if n_pad != N:
        x_bcn = jnp.pad(x_bcn, ((0, 0), (0, 0), (0, n_pad - N)))

    # Pack the three 1x1-conv weights/biases; fold the attention scale into t.
    w_tpg = jnp.concatenate(
        [params["w_t"] * scale, params["w_p"], params["w_g"]], axis=1)   # (C, 3*rd)
    b_tpg = jnp.concatenate(
        [params["b_t"] * scale, params["b_p"], params["b_g"]], axis=1)   # (1, 3*rd)

    vmem = _vmem_limit_bytes()
    wfull = lambda b, q: (0, 0)

    y, gram, ssum = pl.pallas_call(
        functools.partial(_attn_stats_kernel, rd=rd, tq=tq, n_valid=N, n_pad=n_pad),
        out_shape=(
            jax.ShapeDtypeStruct((B, n_pad, rd), jnp.float32),   # y (narrow intermediate)
            jax.ShapeDtypeStruct((B, rd, rd), jnp.float32),      # per-batch sum(y y^T)
            jax.ShapeDtypeStruct((B, 1, rd), jnp.float32),       # per-batch sum(y)
        ),
        grid_spec=pltpu.PrefetchScalarGridSpec(
            num_scalar_prefetch=0,
            grid=(B, n_q),
            in_specs=[
                pl.BlockSpec((None, C, n_pad), lambda b, q: (b, 0, 0)),  # x, per-batch resident
                pl.BlockSpec((C, 3 * rd), wfull),                        # packed W_t*s | W_p | W_g
                pl.BlockSpec((1, 3 * rd), wfull),                        # packed biases
            ],
            out_specs=[
                pl.BlockSpec((None, tq, rd), lambda b, q: (b, q, 0)),
                pl.BlockSpec((None, rd, rd), lambda b, q: (b, 0, 0)),
                pl.BlockSpec((None, 1, rd), lambda b, q: (b, 0, 0)),
            ],
            scratch_shapes=[
                pltpu.VMEM((n_pad, rd), jnp.float32),   # theta (all queries of this batch)
                pltpu.VMEM((n_pad, rd), jnp.float32),   # phi
                pltpu.VMEM((n_pad, rd), jnp.float32),   # g
            ],
        ),
        compiler_params=pltpu.CompilerParams(
            dimension_semantics=("parallel", "arbitrary"),
            vmem_limit_bytes=vmem,
        ),
    )(x_bcn, w_tpg, b_tpg)

    # ---- O(rd^2 * C) glue: reconstruct batch stats of pre = y @ W_z + b_z, fold BN.
    cnt = float(B * N)
    G = jnp.sum(gram, axis=0)                              # (rd, rd)  = sum_n y_n y_n^T
    sv = jnp.sum(ssum, axis=0)                             # (1, rd)   = sum_n y_n
    w_z, b_z = params["w_z"], params["b_z"]                # (rd, C), (1, C)
    sW = sv @ w_z                                          # (1, C)
    sum_pre = sW + cnt * b_z
    mean = sum_pre / cnt                                   # (1, C)
    quad = jnp.sum((G @ w_z) * w_z, axis=0, keepdims=True)  # w_c^T G w_c  -> (1, C)
    sumsq = quad + 2.0 * b_z * sW + cnt * b_z * b_z
    var = jnp.maximum(sumsq / cnt - mean * mean, 0.0)      # biased batch variance
    bn_scale = params["gamma"] * lax.rsqrt(var + eps)
    bn_shift = params["beta"] - mean * bn_scale
    wzt_eff = jnp.transpose(w_z * bn_scale)                # (C, rd)
    bzt_eff = jnp.transpose(b_z * bn_scale + bn_shift)     # (C, 1)

    # ---- Kernel B: streaming z-conv + BN + residual, NCHW-native output.
    tqb = next((c for c in (1024, 512, 256, 128) if n_pad % c == 0), tq)
    n_b = n_pad // tqb

    out_p = pl.pallas_call(
        _z_bn_residual_kernel,
        out_shape=jax.ShapeDtypeStruct((B, C, n_pad), x_nchw.dtype),
        grid_spec=pltpu.PrefetchScalarGridSpec(
            num_scalar_prefetch=0,
            grid=(B, n_b),
            in_specs=[
                pl.BlockSpec((None, tqb, rd), lambda b, j: (b, j, 0)),   # y
                pl.BlockSpec((None, C, tqb), lambda b, j: (b, 0, j)),    # x (residual, NCHW)
                pl.BlockSpec((C, rd), wfull),                            # (W_z * bn_scale)^T
                pl.BlockSpec((C, 1), wfull),                             # folded bias
            ],
            out_specs=pl.BlockSpec((None, C, tqb), lambda b, j: (b, 0, j)),
        ),
        compiler_params=pltpu.CompilerParams(
            dimension_semantics=("parallel", "parallel"),
            vmem_limit_bytes=vmem,
        ),
    )(y, x_bcn, wzt_eff, bzt_eff)

    if n_pad != N:
        out_p = out_p[:, :, :N]
    return out_p.reshape(B, C, H, W)


# ---------------------------------------------------------------------------
# Pure-JAX reference (exact PyTorch forward semantics) for correctness checking
# ---------------------------------------------------------------------------
def non_local_attn_ref(x_nchw, params, eps=1e-5):
    B, C, H, W = x_nchw.shape
    N = H * W
    xf = jnp.transpose(x_nchw.reshape(B, C, N), (0, 2, 1))              # (B, N, C)
    t = xf @ params["w_t"] + params["b_t"]                              # (B, N, rd)
    p = xf @ params["w_p"] + params["b_p"]
    g = xf @ params["w_g"] + params["b_g"]
    att = jnp.einsum("bnc,bmc->bnm", t, p) * params["scale"]            # (B, N, N)
    att = jax.nn.softmax(att, axis=-1)
    y = jnp.einsum("bnm,bmc->bnc", att, g)                              # (B, N, rd)
    pre = y @ params["w_z"] + params["b_z"]                             # (B, N, C)
    mean = jnp.mean(pre, axis=(0, 1), keepdims=True)
    var = jnp.mean((pre - mean) ** 2, axis=(0, 1), keepdims=True)
    bn = (pre - mean) * lax.rsqrt(var + eps) * params["gamma"] + params["beta"]
    out = bn + xf
    return jnp.transpose(out, (0, 2, 1)).reshape(B, C, H, W)


def make_divisible(v, divisor=8, min_value=None, round_limit=0.9):
    min_value = min_value or divisor
    new_v = max(min_value, int(v + divisor / 2) // divisor * divisor)
    if new_v < round_limit * v:
        new_v += divisor
    return int(new_v)


def init_params(key, channels, rd_ratio=1.0 / 8, rd_divisor=8, use_scale=True):
    rd = make_divisible(channels * rd_ratio, rd_divisor)
    k = jax.random.split(key, 4)
    std_tpg = (2.0 / rd) ** 0.5            # kaiming_normal fan_out for 1x1 conv
    std_z = (2.0 / channels) ** 0.5
    return {
        # 1x1 conv weights stored channels-last as (C_in, C_out); biases (1, C_out)
        "w_t": std_tpg * jax.random.normal(k[0], (channels, rd), jnp.float32),
        "w_p": std_tpg * jax.random.normal(k[1], (channels, rd), jnp.float32),
        "w_g": std_tpg * jax.random.normal(k[2], (channels, rd), jnp.float32),
        "w_z": std_z * jax.random.normal(k[3], (rd, channels), jnp.float32),
        "b_t": jnp.zeros((1, rd), jnp.float32),
        "b_p": jnp.zeros((1, rd), jnp.float32),
        "b_g": jnp.zeros((1, rd), jnp.float32),
        "b_z": jnp.zeros((1, channels), jnp.float32),
        # BatchNorm2d with nn.init.constant_(weight, 0) / constant_(bias, 0)
        "gamma": jnp.zeros((1, channels), jnp.float32),
        "beta": jnp.zeros((1, channels), jnp.float32),
        "scale": channels ** (-0.5) if use_scale else 1.0,
    }


def randomize_affine(params, key, channels):
    """Non-degenerate biases / BN affine so the attention + BN path is exercised."""
    rd = params["w_t"].shape[1]
    ks = jax.random.split(key, 6)
    p = dict(params)
    p.update(
        b_t=0.1 * jax.random.normal(ks[0], (1, rd), jnp.float32),
        b_p=0.1 * jax.random.normal(ks[1], (1, rd), jnp.float32),
        b_g=0.1 * jax.random.normal(ks[2], (1, rd), jnp.float32),
        b_z=0.1 * jax.random.normal(ks[3], (1, channels), jnp.float32),
        gamma=1.0 + 0.1 * jax.random.normal(ks[4], (1, channels), jnp.float32),
        beta=0.1 * jax.random.normal(ks[5], (1, channels), jnp.float32),
    )
    return p


if __name__ == "__main__":
    key = jax.random.PRNGKey(0)
    k_x, k_p, k_b, k_x2, k_p2, k_b2 = jax.random.split(key, 6)

    # Case 1: 16x16 spatial (N=256, multiple of the 128 query tile), default init.
    B, C, H, W = 2, 32, 16, 16            # channels=32, rd_ratio=1/8, divisor=8 -> rd=8
    x = jax.random.normal(k_x, (B, C, H, W), jnp.float32)
    params = init_params(k_p, C)

    out = jax.block_until_ready(non_local_attn(x, params))
    ref = non_local_attn_ref(x, params)
    assert out.shape == x.shape
    assert jnp.allclose(out, ref, atol=1e-4, rtol=1e-4), "mismatch vs reference (default init)"
    assert jnp.allclose(out, x, atol=1e-5, rtol=1e-5), "zero-init BN should make block identity"

    # Case 2: same shape, non-degenerate BN/bias values.
    params2 = randomize_affine(params, k_b, C)
    out2 = jax.block_until_ready(non_local_attn(x, params2))
    ref2 = non_local_attn_ref(x, params2)
    err2 = float(jnp.max(jnp.abs(out2 - ref2)))
    assert jnp.allclose(out2, ref2, atol=1e-4, rtol=1e-4), f"mismatch vs reference: {err2}"

    # Case 3: 14x14 spatial (N=196, NOT a multiple of 128) -> padded/masked path.
    B3, C3, H3, W3 = 2, 64, 14, 14
    x3 = jax.random.normal(k_x2, (B3, C3, H3, W3), jnp.float32)
    params3 = randomize_affine(init_params(k_p2, C3), k_b2, C3)
    out3 = jax.block_until_ready(non_local_attn(x3, params3))
    ref3 = non_local_attn_ref(x3, params3)
    err3 = float(jnp.max(jnp.abs(out3 - ref3)))
    assert jnp.allclose(out3, ref3, atol=1e-4, rtol=1e-4), f"mismatch (padded path): {err3}"

    print("KERNEL_OK")
</pallas_src>

<mosaic_0001>
module attributes {stable_mosaic.version = 11 : i64} {
  func.func @_attn_stats_kernel(%arg0: i32, %arg1: i32, %arg2: memref<1x32x256xf32, #tpu.memory_space<vmem>>, %arg3: memref<32x24xf32, #tpu.memory_space<vmem>>, %arg4: memref<1x24xf32, #tpu.memory_space<vmem>>, %arg5: memref<1x128x8xf32, #tpu.memory_space<vmem>>, %arg6: memref<1x8x8xf32, #tpu.memory_space<vmem>>, %arg7: memref<1x1x8xf32, #tpu.memory_space<vmem>>, %arg8: memref<256x8xf32, #tpu.memory_space<vmem>>, %arg9: memref<256x8xf32, #tpu.memory_space<vmem>>, %arg10: memref<256x8xf32, #tpu.memory_space<vmem>>) attributes {dimension_semantics = [#tpu.dimension_semantics<parallel>, #tpu.dimension_semantics<arbitrary>], iteration_bounds = array<i64: 2, 2>, scalar_prefetch = 0 : i64, scratch_operands = 3 : i64, tpu.core_type = #tpu.core_type<tc>, window_params = [{transform_indices = @transform_0, window_bounds = array<i64: 1, 32, 256>}, {pipeline_mode = #tpu.pipeline_mode<synchronous>, transform_indices = @transform_1, window_bounds = array<i64: 32, 24>}, {pipeline_mode = #tpu.pipeline_mode<synchronous>, transform_indices = @transform_2, window_bounds = array<i64: 1, 24>}, {transform_indices = @transform_3, window_bounds = array<i64: 1, 128, 8>}, {transform_indices = @transform_4, window_bounds = array<i64: 1, 8, 8>}, {transform_indices = @transform_5, window_bounds = array<i64: 1, 1, 8>}]} {
    %c0_i32 = arith.constant 0 : i32
    %0 = arith.cmpi eq, %arg1, %c0_i32 : i32
    %1 = arith.extui %0 : i1 to i32
    %c0_i32_0 = arith.constant 0 : i32
    %2 = arith.cmpi ne, %1, %c0_i32_0 : i32
    scf.if %2 {
      %c0_25 = arith.constant 0 : index
      %c0_26 = arith.constant 0 : index
      %c0_27 = arith.constant 0 : index
      %39 = vector.load %arg2[%c0_25, %c0_26, %c0_27] : memref<1x32x256xf32, #tpu.memory_space<vmem>>, vector<1x32x256xf32>
      %40 = vector.shape_cast %39 : vector<1x32x256xf32> to vector<32x256xf32>
      %c0_28 = arith.constant 0 : index
      %c0_29 = arith.constant 0 : index
      %41 = vector.load %arg3[%c0_28, %c0_29] : memref<32x24xf32, #tpu.memory_space<vmem>>, vector<32x24xf32>
      %cst_30 = arith.constant dense<0.000000e+00> : vector<256x24xf32>
      %42 = tpu.matmul %40, %41, %cst_30 {dimension_numbers = #tpu.dot_dimension_numbers<[0], [0], [1], [1], [0, 1, 1, 1], [], []>} : vector<32x256xf32>, vector<32x24xf32>, vector<256x24xf32> -> vector<256x24xf32>
      %c0_31 = arith.constant 0 : index
      %c0_32 = arith.constant 0 : index
      %43 = vector.load %arg4[%c0_31, %c0_32] : memref<1x24xf32, #tpu.memory_space<vmem>>, vector<1x24xf32>
      %44 = vector.broadcast %43 : vector<1x24xf32> to vector<256x24xf32>
      %45 = arith.addf %42, %44 : vector<256x24xf32>
      %46 = vector.extract_strided_slice %45 {offsets = [0, 0], sizes = [256, 8], strides = [1, 1]} : vector<256x24xf32> to vector<256x8xf32>
      %c0_33 = arith.constant 0 : index
      %c0_34 = arith.constant 0 : index
      %47 = vector.load %arg8[%c0_33, %c0_34] : memref<256x8xf32, #tpu.memory_space<vmem>>, vector<256x8xf32>
      tpu.vector_store %arg8[%c0_33, %c0_34], %46 {strides = array<i32>} : memref<256x8xf32, #tpu.memory_space<vmem>>, vector<256x8xf32>,
      %48 = vector.extract_strided_slice %45 {offsets = [0, 8], sizes = [256, 8], strides = [1, 1]} : vector<256x24xf32> to vector<256x8xf32>
      %c0_35 = arith.constant 0 : index
      %c0_36 = arith.constant 0 : index
      %49 = vector.load %arg9[%c0_35, %c0_36] : memref<256x8xf32, #tpu.memory_space<vmem>>, vector<256x8xf32>
      tpu.vector_store %arg9[%c0_35, %c0_36], %48 {strides = array<i32>} : memref<256x8xf32, #tpu.memory_space<vmem>>, vector<256x8xf32>,
      %50 = vector.extract_strided_slice %45 {offsets = [0, 16], sizes = [256, 8], strides = [1, 1]} : vector<256x24xf32> to vector<256x8xf32>
      %c0_37 = arith.constant 0 : index
      %c0_38 = arith.constant 0 : index
      %51 = vector.load %arg10[%c0_37, %c0_38] : memref<256x8xf32, #tpu.memory_space<vmem>>, vector<256x8xf32>
      tpu.vector_store %arg10[%c0_37, %c0_38], %50 {strides = array<i32>} : memref<256x8xf32, #tpu.memory_space<vmem>>, vector<256x8xf32>,
      %cst_39 = arith.constant 0.000000e+00 : f32
      %52 = vector.broadcast %cst_39 : f32 to vector<8x8xf32>
      %c0_40 = arith.constant 0 : index
      %c0_41 = arith.constant 0 : index
      %c0_42 = arith.constant 0 : index
      %53 = vector.load %arg6[%c0_40, %c0_41, %c0_42] : memref<1x8x8xf32, #tpu.memory_space<vmem>>, vector<1x8x8xf32>
      %54 = vector.shape_cast %53 : vector<1x8x8xf32> to vector<8x8xf32>
      %55 = vector.shape_cast %52 : vector<8x8xf32> to vector<1x8x8xf32>
      tpu.vector_store %arg6[%c0_40, %c0_41, %c0_42], %55 {strides = array<i32>} : memref<1x8x8xf32, #tpu.memory_space<vmem>>, vector<1x8x8xf32>,
      %cst_43 = arith.constant 0.000000e+00 : f32
      %56 = vector.broadcast %cst_43 : f32 to vector<1x8xf32>
      %c0_44 = arith.constant 0 : index
      %c0_45 = arith.constant 0 : index
      %c0_46 = arith.constant 0 : index
      %57 = vector.load %arg7[%c0_44, %c0_45, %c0_46] : memref<1x1x8xf32, #tpu.memory_space<vmem>>, vector<1x1x8xf32>
      %58 = vector.shape_cast %57 : vector<1x1x8xf32> to vector<1x8xf32>
      %59 = vector.shape_cast %56 : vector<1x8xf32> to vector<1x1x8xf32>
      tpu.vector_store %arg7[%c0_44, %c0_45, %c0_46], %59 {strides = array<i32>} : memref<1x1x8xf32, #tpu.memory_space<vmem>>, vector<1x1x8xf32>,
    } else {
    }
    %c128_i32 = arith.constant 128 : i32
    %3 = arith.muli %arg1, %c128_i32 : i32
    %4 = tpu.assume_multiple %3, 128 : i32
    %5 = arith.index_cast %4 : i32 to index
    %c0 = arith.constant 0 : index
    %6 = vector.load %arg8[%5, %c0] : memref<256x8xf32, #tpu.memory_space<vmem>>, vector<128x8xf32>
    %c0_1 = arith.constant 0 : index
    %c0_2 = arith.constant 0 : index
    %7 = vector.load %arg9[%c0_1, %c0_2] : memref<256x8xf32, #tpu.memory_space<vmem>>, vector<256x8xf32>
    %cst = arith.constant dense<0.000000e+00> : vector<128x256xf32>
    %8 = tpu.matmul %6, %7, %cst {dimension_numbers = #tpu.dot_dimension_numbers<[1], [1], [0], [0], [0, 0, 1, 0], [], []>} : vector<128x8xf32>, vector<256x8xf32>, vector<128x256xf32> -> vector<128x256xf32>
    %cst_3 = arith.constant dense<0xFF800000> : vector<128xf32>
    %9 = vector.multi_reduction <maximumf>, %8, %cst_3 [1] : vector<128x256xf32> to vector<128xf32>
    %10 = vector.shape_cast %9 : vector<128xf32> to vector<128x1xf32>
    %11 = vector.broadcast %10 : vector<128x1xf32> to vector<128x256xf32>
    %12 = arith.subf %8, %11 : vector<128x256xf32>
    %13 = math.exp %12 : vector<128x256xf32>
    %cst_4 = arith.constant dense<0.000000e+00> : vector<128xf32>
    %14 = vector.multi_reduction <add>, %13, %cst_4 [1] : vector<128x256xf32> to vector<128xf32>
    %15 = vector.shape_cast %14 : vector<128xf32> to vector<128x1xf32>
    %c0_5 = arith.constant 0 : index
    %c0_6 = arith.constant 0 : index
    %16 = vector.load %arg10[%c0_5, %c0_6] : memref<256x8xf32, #tpu.memory_space<vmem>>, vector<256x8xf32>
    %cst_7 = arith.constant dense<0.000000e+00> : vector<128x8xf32>
    %17 = tpu.matmul %13, %16, %cst_7 {dimension_numbers = #tpu.dot_dimension_numbers<[1], [0], [0], [1], [0, 0, 1, 1], [], []>} : vector<128x256xf32>, vector<256x8xf32>, vector<128x8xf32> -> vector<128x8xf32>
    %18 = tpu.reciprocal %15 : vector<128x1xf32> -> vector<128x1xf32>
    %19 = vector.broadcast %18 : vector<128x1xf32> to vector<128x8xf32>
    %20 = arith.mulf %17, %19 : vector<128x8xf32>
    %c0_8 = arith.constant 0 : index
    %c0_9 = arith.constant 0 : index
    %c0_10 = arith.constant 0 : index
    %21 = vector.load %arg5[%c0_8, %c0_9, %c0_10] : memref<1x128x8xf32, #tpu.memory_space<vmem>>, vector<1x128x8xf32>
    %22 = vector.shape_cast %21 : vector<1x128x8xf32> to vector<128x8xf32>
    %23 = vector.shape_cast %20 : vector<128x8xf32> to vector<1x128x8xf32>
    tpu.vector_store %arg5[%c0_8, %c0_9, %c0_10], %23 {strides = array<i32>} : memref<1x128x8xf32, #tpu.memory_space<vmem>>, vector<1x128x8xf32>,
    %c0_11 = arith.constant 0 : index
    %c0_12 = arith.constant 0 : index
    %c0_13 = arith.constant 0 : index
    %24 = vector.load %arg6[%c0_11, %c0_12, %c0_13] : memref<1x8x8xf32, #tpu.memory_space<vmem>>, vector<1x8x8xf32>
    %25 = vector.shape_cast %24 : vector<1x8x8xf32> to vector<8x8xf32>
    %cst_14 = arith.constant dense<0.000000e+00> : vector<8x8xf32>
    %26 = tpu.matmul %20, %20, %cst_14 {dimension_numbers = #tpu.dot_dimension_numbers<[0], [0], [1], [1], [0, 1, 1, 1], [], []>} : vector<128x8xf32>, vector<128x8xf32>, vector<8x8xf32> -> vector<8x8xf32>
    %27 = arith.addf %25, %26 : vector<8x8xf32>
    %c0_15 = arith.constant 0 : index
    %c0_16 = arith.constant 0 : index
    %c0_17 = arith.constant 0 : index
    %28 = vector.load %arg6[%c0_15, %c0_16, %c0_17] : memref<1x8x8xf32, #tpu.memory_space<vmem>>, vector<1x8x8xf32>
    %29 = vector.shape_cast %28 : vector<1x8x8xf32> to vector<8x8xf32>
    %30 = vector.shape_cast %27 : vector<8x8xf32> to vector<1x8x8xf32>
    tpu.vector_store %arg6[%c0_15, %c0_16, %c0_17], %30 {strides = array<i32>} : memref<1x8x8xf32, #tpu.memory_space<vmem>>, vector<1x8x8xf32>,
    %c0_18 = arith.constant 0 : index
    %c0_19 = arith.constant 0 : index
    %c0_20 = arith.constant 0 : index
    %31 = vector.load %arg7[%c0_18, %c0_19, %c0_20] : memref<1x1x8xf32, #tpu.memory_space<vmem>>, vector<1x1x8xf32>
    %32 = vector.shape_cast %31 : vector<1x1x8xf32> to vector<1x8xf32>
    %cst_21 = arith.constant dense<0.000000e+00> : vector<8xf32>
    %33 = vector.multi_reduction <add>, %20, %cst_21 [0] : vector<128x8xf32> to vector<8xf32>
    %34 = vector.shape_cast %33 : vector<8xf32> to vector<1x8xf32>
    %35 = arith.addf %32, %34 : vector<1x8xf32>
    %c0_22 = arith.constant 0 : index
    %c0_23 = arith.constant 0 : index
    %c0_24 = arith.constant 0 : index
    %36 = vector.load %arg7[%c0_22, %c0_23, %c0_24] : memref<1x1x8xf32, #tpu.memory_space<vmem>>, vector<1x1x8xf32>
    %37 = vector.shape_cast %36 : vector<1x1x8xf32> to vector<1x8xf32>
    %38 = vector.shape_cast %35 : vector<1x8xf32> to vector<1x1x8xf32>
    tpu.vector_store %arg7[%c0_22, %c0_23, %c0_24], %38 {strides = array<i32>} : memref<1x1x8xf32, #tpu.memory_space<vmem>>, vector<1x1x8xf32>,
    return
  }
  func.func @transform_0(%arg0: i32, %arg1: i32) -> (i32, i32, i32) {
    %c0_i32 = arith.constant 0 : i32
    %c0_i32_0 = arith.constant 0 : i32
    %c0_i32_1 = arith.constant 0 : i32
    return %arg0, %c0_i32, %c0_i32_0 : i32, i32, i32
  }
  func.func @transform_1(%arg0: i32, %arg1: i32) -> (i32, i32) {
    %c0_i32 = arith.constant 0 : i32
    %c0_i32_0 = arith.constant 0 : i32
    %c0_i32_1 = arith.constant 0 : i32
    return %c0_i32, %c0_i32_0 : i32, i32
  }
  func.func @transform_2(%arg0: i32, %arg1: i32) -> (i32, i32) {
    %c0_i32 = arith.constant 0 : i32
    %c0_i32_0 = arith.constant 0 : i32
    %c0_i32_1 = arith.constant 0 : i32
    return %c0_i32, %c0_i32_0 : i32, i32
  }
  func.func @transform_3(%arg0: i32, %arg1: i32) -> (i32, i32, i32) {
    %c0_i32 = arith.constant 0 : i32
    %c0_i32_0 = arith.constant 0 : i32
    return %arg0, %arg1, %c0_i32 : i32, i32, i32
  }
  func.func @transform_4(%arg0: i32, %arg1: i32) -> (i32, i32, i32) {
    %c0_i32 = arith.constant 0 : i32
    %c0_i32_0 = arith.constant 0 : i32
    %c0_i32_1 = arith.constant 0 : i32
    return %arg0, %c0_i32, %c0_i32_0 : i32, i32, i32
  }
  func.func @transform_5(%arg0: i32, %arg1: i32) -> (i32, i32, i32) {
    %c0_i32 = arith.constant 0 : i32
    %c0_i32_0 = arith.constant 0 : i32
    %c0_i32_1 = arith.constant 0 : i32
    return %arg0, %c0_i32, %c0_i32_0 : i32, i32, i32
  }
}

</mosaic_0001>

<llo_original>
// kernel: tpu_custom_call.1
$region0: #{tpu_custom_call.1}
  #allocation0 [shape = 'u32[]', space=smem, size = 0x4, offset = 0x4, fixed_abs, tag = 'smem constant byte address 0x4 - core index']
  #allocation1 [shape = 'u32[144,128]{1,0:T(1,128)}', space=vmem, size = 0x12000, scoped, tag = 'internal scratch']
  #allocation2 [shape = 'f32[256,8]{1,0:T(8,128)}', space=vmem, size = 0x20000, scoped, tag = 'scratch operand']
  #allocation3 [shape = 'f32[256,8]{1,0:T(8,128)}', space=vmem, size = 0x20000, scoped, tag = 'scratch operand']
  #allocation4 [shape = 'f32[256,8]{1,0:T(8,128)}', space=vmem, size = 0x20000, scoped, tag = 'scratch operand']
  %s0 = inlined_call_operand.hbm [shape: f32[2,32,256], index: 0, kind: input, shape index: {}]
  %s1 = inlined_call_operand.vmem [shape: f32[32,24], index: 1, kind: input, shape index: {}]
  %s2 = inlined_call_operand.vmem [shape: f32[1,24], index: 2, kind: input, shape index: {}]
  %s3 = inlined_call_operand.vmem [shape: f32[2,256,8], index: 3, kind: output, shape index: {0}]
  %s4 = inlined_call_operand.hbm [shape: f32[2,8,8], index: 4, kind: output, shape index: {1}]
  %s5 = inlined_call_operand.hbm [shape: f32[2,1,8], index: 5, kind: output, shape index: {2}]
  %6 = xla_tuple %s3, %s4, %s5
  %s7 = sld [smem:[#allocation0]]
  $region69: #{tpu_custom_call.1} parent=0
    _
  %s9 = ssub.s32 1, %s7
  %s10 = scalar_select 0, %s9, %s7
  $region1: #{tpu_custom_call.1} parent=0
    #allocation5 [shape = 'u8[65536]{0}', space=vmem, size = 0x10000, scoped, tag = 'input window, operand 0']
    #allocation6 [shape = 's32[2]{0}', space=sflag, size = 0x8, scoped, tag = 'scoped memory for tpu_custom_call.1']
    #allocation7 [shape = 's32[2]{0}', space=sflag, size = 0x8, scoped, tag = 'scoped memory for tpu_custom_call.1']
    #allocation8 [shape = 'u8[8192]{0}', space=vmem, size = 0x2000, scoped, tag = 'output window, operand 1']
    #allocation9 [shape = 'u8[1024]{0}', space=vmem, size = 0x400, scoped, tag = 'output window, operand 2']
    #allocation10 [shape = 's32[2]{0}', space=sflag, size = 0x8, scoped, tag = 'scoped memory for tpu_custom_call.1']
    %11 = vsyncpa [#allocation6], 0
    %s12 = scalar_lea.sflag [#allocation6], 1
    %13 = vsyncpa %s12, 0
    %14 = vsyncpa [#allocation7], 0
    %s15 = scalar_lea.sflag [#allocation7], 1
    %16 = vsyncpa %s15, 0
    %17 = vsyncpa [#allocation10], 0
    %s18 = scalar_lea.sflag [#allocation10], 1
    %19 = vsyncpa %s18, 0
    loop: start=0, step=1, limit=6
    $region2: #{tpu_custom_call.1} parent=1 // loop_pre_header
      _
    $region3: #{tpu_custom_call.1} parent=1 // loop_header
      %s21 = sphi 0, %s25
      %p22 = scmp.ge.s32.totalorder %s21, 6
      %s28 = sphi 0, %s40
      %s29 = sphi 0, %s36
      %s30 = sphi 0, %s28
      %s31 = sphi 0, %s29
      %s32 = sphi 0, %s30
      %s33 = sphi 0, %s31
      %s43 = sphi 0, %s45
      %s46 = sphi 0, %s43
      %s47 = sphi 0, %s46
      %s63 = sphi 0, %s47
      %s67 = sphi 0, %s67
      %s69 = sphi 0, %s67
      %s70 = sphi 0, %s69
      %s84 = sphi 0, %s70
      %s88 = sphi 0, %s88
      %s90 = sphi 0, %s88
      %s91 = sphi 0, %s90
      %s105 = sphi 0, %s91
      %s113 = sphi 0, %s115
      %s116 = sphi 0, %s113
      %s117 = sphi 0, %s116
      %s133 = sphi 0, %s117
      %s139 = sphi 0, %s141
      %s142 = sphi 0, %s139
      %s143 = sphi 0, %s142
      %s159 = sphi 0, %s143
      %s165 = sphi 0, %s167
      %s168 = sphi 0, %s165
      %s169 = sphi 0, %s168
      %s185 = sphi 0, %s169
    $region4: #{tpu_custom_call.1} parent=1 // loop_header_branch
      %24 = sbr.rel (%p22) target = $region8
    $region5: #{tpu_custom_call.1} parent=1 // loop_body
      %s26 = ssub.s32 %s21, 1
      %s27 = ssub.s32 %s21, 2
      %s34 = sadd.s32 1, %s29
      %p35 = scmp.ge.s32.totalorder %s34, 2
      %s36 = scalar_select %p35, 0, %s34
      %s37 = sadd.s32 1, %s28
      %s38 = scalar_select %p35, %s37, %s28
      %p39 = scmp.ge.s32.totalorder %s38, 2
      %s40 = scalar_select %p39, 0, %s38
      %s41 = ssub.s32 %s28, %s40
      %p42 = scmp.eq.s32.totalorder %s41, 0
      %s44 = sadd.s32 %s43, 1
      %s45 = scalar_select %p42, %s43, %s44
      %p48 = pneg %p42
      %p49 = scmp.eq.s32.totalorder %s21, 3
      %p50 = por %p48, %p49
      %p51 = scmp.ne.s32.totalorder %s43, %s46
      %p52 = scmp.eq.s32.totalorder %s21, 0
      %p53 = por %p51, %p52
      %p54 = scmp.ne.s32.totalorder %s43, %s46
      %p55 = scmp.eq.s32.totalorder %s26, 3
      %p56 = por %p54, %p55
      %p57 = scmp.ne.s32.totalorder %s46, %s47
      %p58 = scmp.eq.s32.totalorder %s26, 0
      %p59 = por %p57, %p58
      %p60 = scmp.ne.s32.totalorder %s46, %s47
      %p61 = scmp.eq.s32.totalorder %s27, 3
      %p62 = por %p60, %p61
      %p64 = scmp.ne.s32.totalorder %s47, %s63
      %p65 = scmp.eq.s32.totalorder %s27, 0
      %p66 = por %p64, %p65
      %s68 = sadd.s32 %s67, 1
      %p71 = scmp.eq.s32.totalorder %s21, 3
      %p72 = scmp.ne.s32.totalorder %s67, %s69
      %p73 = scmp.eq.s32.totalorder %s21, 0
      %p74 = por %p72, %p73
      %p75 = scmp.ne.s32.totalorder %s67, %s69
      %p76 = scmp.eq.s32.totalorder %s26, 3
      %p77 = por %p75, %p76
      %p78 = scmp.ne.s32.totalorder %s69, %s70
      %p79 = scmp.eq.s32.totalorder %s26, 0
      %p80 = por %p78, %p79
      %p81 = scmp.ne.s32.totalorder %s69, %s70
      %p82 = scmp.eq.s32.totalorder %s27, 3
      %p83 = por %p81, %p82
      %p85 = scmp.ne.s32.totalorder %s70, %s84
      %p86 = scmp.eq.s32.totalorder %s27, 0
      %p87 = por %p85, %p86
      %s89 = sadd.s32 %s88, 1
      %p92 = scmp.eq.s32.totalorder %s21, 3
      %p93 = scmp.ne.s32.totalorder %s88, %s90
      %p94 = scmp.eq.s32.totalorder %s21, 0
      %p95 = por %p93, %p94
      %p96 = scmp.ne.s32.totalorder %s88, %s90
      %p97 = scmp.eq.s32.totalorder %s26, 3
      %p98 = por %p96, %p97
      %p99 = scmp.ne.s32.totalorder %s90, %s91
      %p100 = scmp.eq.s32.totalorder %s26, 0
      %p101 = por %p99, %p100
      %p102 = scmp.ne.s32.totalorder %s90, %s91
      %p103 = scmp.eq.s32.totalorder %s27, 3
      %p104 = por %p102, %p103
      %p106 = scmp.ne.s32.totalorder %s91, %s105
      %p107 = scmp.eq.s32.totalorder %s27, 0
      %p108 = por %p106, %p107
      %s109 = ssub.s32 %s28, %s40
      %s110 = ssub.s32 %s29, %s36
      %s111 = sor.u32 %s109, %s110
      %p112 = scmp.eq.s32.totalorder %s111, 0
      %s114 = sadd.s32 %s113, 1
      %s115 = scalar_select %p112, %s113, %s114
      %p118 = pneg %p112
      %p119 = scmp.eq.s32.totalorder %s21, 3
      %p120 = por %p118, %p119
      %p121 = scmp.ne.s32.totalorder %s113, %s116
      %p122 = scmp.eq.s32.totalorder %s21, 0
      %p123 = por %p121, %p122
      %p124 = scmp.ne.s32.totalorder %s113, %s116
      %p125 = scmp.eq.s32.totalorder %s26, 3
      %p126 = por %p124, %p125
      %p127 = scmp.ne.s32.totalorder %s116, %s117
      %p128 = scmp.eq.s32.totalorder %s26, 0
      %p129 = por %p127, %p128
      %p130 = scmp.ne.s32.totalorder %s116, %s117
      %p131 = scmp.eq.s32.totalorder %s27, 3
      %p132 = por %p130, %p131
      %p134 = scmp.ne.s32.totalorder %s117, %s133
      %p135 = scmp.eq.s32.totalorder %s27, 0
      %p136 = por %p134, %p135
      %s137 = ssub.s32 %s28, %s40
      %p138 = scmp.eq.s32.totalorder %s137, 0
      %s140 = sadd.s32 %s139, 1
      %s141 = scalar_select %p138, %s139, %s140
      %p144 = pneg %p138
      %p145 = scmp.eq.s32.totalorder %s21, 3
      %p146 = por %p144, %p145
      %p147 = scmp.ne.s32.totalorder %s139, %s142
      %p148 = scmp.eq.s32.totalorder %s21, 0
      %p149 = por %p147, %p148
      %p150 = scmp.ne.s32.totalorder %s139, %s142
      %p151 = scmp.eq.s32.totalorder %s26, 3
      %p152 = por %p150, %p151
      %p153 = scmp.ne.s32.totalorder %s142, %s143
      %p154 = scmp.eq.s32.totalorder %s26, 0
      %p155 = por %p153, %p154
      %p156 = scmp.ne.s32.totalorder %s142, %s143
      %p157 = scmp.eq.s32.totalorder %s27, 3
      %p158 = por %p156, %p157
      %p160 = scmp.ne.s32.totalorder %s143, %s159
      %p161 = scmp.eq.s32.totalorder %s27, 0
      %p162 = por %p160, %p161
      %s163 = ssub.s32 %s28, %s40
      %p164 = scmp.eq.s32.totalorder %s163, 0
      %s166 = sadd.s32 %s165, 1
      %s167 = scalar_select %p164, %s165, %s166
      %p170 = pneg %p164
      %p171 = scmp.eq.s32.totalorder %s21, 3
      %p172 = por %p170, %p171
      %p173 = scmp.ne.s32.totalorder %s165, %s168
      %p174 = scmp.eq.s32.totalorder %s21, 0
      %p175 = por %p173, %p174
      %p176 = scmp.ne.s32.totalorder %s165, %s168
      %p177 = scmp.eq.s32.totalorder %s26, 3
      %p178 = por %p176, %p177
      %p179 = scmp.ne.s32.totalorder %s168, %s169
      %p180 = scmp.eq.s32.totalorder %s26, 0
      %p181 = por %p179, %p180
      %p182 = scmp.ne.s32.totalorder %s168, %s169
      %p183 = scmp.eq.s32.totalorder %s27, 3
      %p184 = por %p182, %p183
      %p186 = scmp.ne.s32.totalorder %s169, %s185
      %p187 = scmp.eq.s32.totalorder %s27, 0
      %p188 = por %p186, %p187
      %p189 = scmp.le.s32.totalorder 1, %s21
      %p190 = scmp.lt.s32.totalorder %s21, 5
      %p191 = pnand %p189, %p190
      %p192 = pneg %p191
      // Predicated region
      $region9: #{tpu_custom_call.1} parent=5 // pred_check
        _
      $region10: #{tpu_custom_call.1} parent=5 // pred_check_branch
        %194 = sbr.rel (%p191) target = $region12
      $region11: #{tpu_custom_call.1} parent=5 // pred_region
        %s195 = ssub.s32 %s21, 1
        // Predicated region
        $region13: #{tpu_custom_call.1} parent=11 // pred_check
          %p196 = pneg %p80
        $region14: #{tpu_custom_call.1} parent=11 // pred_check_branch
          %198 = sbr.rel (%p196) target = $region16
        $region15: #{tpu_custom_call.1} parent=11 // pred_region
          _
        $region16: #{tpu_custom_call.1} parent=11 // pred_fallthru
          _
        // Predicated region
        $region17: #{tpu_custom_call.1} parent=11 // pred_check
          %p199 = pneg %p101
        $region18: #{tpu_custom_call.1} parent=11 // pred_check_branch
          %201 = sbr.rel (%p199) target = $region20
        $region19: #{tpu_custom_call.1} parent=11 // pred_region
          _
        $region20: #{tpu_custom_call.1} parent=11 // pred_fallthru
          _
      $region12: #{tpu_custom_call.1} parent=5 // pred_fallthru
        _
      %p202 = scmp.lt.s32.totalorder %s21, 4
      // Predicated region
      $region21: #{tpu_custom_call.1} parent=5 // pred_check
        %p203 = pneg %p202
      $region22: #{tpu_custom_call.1} parent=5 // pred_check_branch
        %205 = sbr.rel (%p203) target = $region24
      $region23: #{tpu_custom_call.1} parent=5 // pred_region
        // Predicated region
        $region25: #{tpu_custom_call.1} parent=23 // pred_check
          %p206 = pneg %p53
        $region26: #{tpu_custom_call.1} parent=23 // pred_check_branch
          %208 = sbr.rel (%p206) target = $region28
        $region27: #{tpu_custom_call.1} parent=23 // pred_region
          %s209 = sand.u32 %s43, 1
          %s210 = scalar_lea.sflag [#allocation6], %s209
          %s211 = sand.u32 %s43, 1
          %s212 = smul.addr %s211, 64
          %s213 = scalar_lea.vmem [#allocation5], %s212
          %s215 = ssub.s32 1024, 1024
          %216 = vsyncadd %s210, %s215
          %s217 = smul.addr %s28, 8
          %s218 = smul.addr %s217, 128
          %s219 = scalar_lea.hbm %s0, %s218
          %s220 = sshll.u32 %s213, 4
          %s221 = int_to_ptr.vmem [resolvable:$true] %s220
          %226 = dma.hbm_to_vmem [thread:$0]  %s219, 1024, %s221, %s210, 256, 256, 16
        $region28: #{tpu_custom_call.1} parent=23 // pred_fallthru
          _
      $region24: #{tpu_custom_call.1} parent=5 // pred_fallthru
        _
      %p227 = scmp.le.s32.totalorder 1, %s21
      %p228 = scmp.lt.s32.totalorder %s21, 5
      %p229 = pnand %p227, %p228
      %p230 = pneg %p229
      // Predicated region
      $region29: #{tpu_custom_call.1} parent=5 // pred_check
        _
      $region30: #{tpu_custom_call.1} parent=5 // pred_check_branch
        %232 = sbr.rel (%p229) target = $region32
      $region31: #{tpu_custom_call.1} parent=5 // pred_region
        %s233 = ssub.s32 %s21, 1
        %s234 = sand.u32 %s46, 1
        %s235 = scalar_lea.sflag [#allocation6], %s234
        %s236 = sand.u32 %s46, 1
        %s237 = smul.addr %s236, 64
        %s238 = scalar_lea.vmem [#allocation5], %s237
        // Predicated region
        $region33: #{tpu_custom_call.1} parent=31 // pred_check
          %p239 = pneg %p59
        $region34: #{tpu_custom_call.1} parent=31 // pred_check_branch
          %241 = sbr.rel (%p239) target = $region36
        $region35: #{tpu_custom_call.1} parent=31 // pred_region
          %242 = dma.done %s235, 1024
        $region36: #{tpu_custom_call.1} parent=31 // pred_fallthru
          _
        %s243 = sand.u32 %s46, 1
        %s244 = scalar_lea.sflag [#allocation6], %s243
        %s245 = sand.u32 %s46, 1
        %s246 = smul.addr %s245, 64
        %s247 = scalar_lea.vmem [#allocation5], %s246
        %p248 = pneg %p59
        %p249 = pneg %p56
        %p250 = pneg %p80
        %p251 = pneg %p77
        %p252 = pneg %p101
        %p253 = pneg %p98
        %p254 = pneg %p129
        %p255 = pneg %p126
        %s256 = smul.u32 16, %s31
        %p257 = scmp.lt.s32.totalorder %s30, 1
        %s258 = scalar_select %p257, %s30, 1
        %p259 = scmp.lt.s32.totalorder %s256, 31
        %s260 = scalar_select %p259, %s256, 31
        %s261 = smul.addr %s258, 32
        %s262 = sadd.s32 %s260, %s261
        %s263 = smul.addr %s262, 8
        %s264 = scalar_lea.vmem %s3, %s263
        %p265 = pneg %p155
        %p266 = pneg %p152
        %s267 = sand.u32 %s142, 1
        %s268 = scalar_lea.sflag [#allocation7], %s267
        %s269 = sand.u32 %s142, 1
        %s270 = smul.addr %s269, 8
        %s271 = scalar_lea.vmem [#allocation8], %s270
        %p272 = pneg %p181
        %p273 = pneg %p178
        %s274 = sand.u32 %s168, 1
        %s275 = scalar_lea.sflag [#allocation10], %s274
        %s276 = sand.u32 %s168, 1
        %s277 = scalar_lea.vmem [#allocation9], %s276
        %s278 = smul.u32 16, %s31
        %p279 = scmp.lt.s32.totalorder %s30, 1
        %s280 = scalar_select %p279, %s30, 1
        %p281 = scmp.lt.s32.totalorder %s278, 31
        %s282 = scalar_select %p281, %s278, 31
        %s283 = smul.addr %s280, 32
        %s284 = sadd.s32 %s282, %s283
        %s285 = smul.addr %s284, 8
        %s286 = scalar_lea.vmem %s3, %s285
        %s287 = smul.u32 16, %s31
        %p288 = scmp.eq.s32.totalorder %s31, 0
        // Predicated region
        $region37: #{tpu_custom_call.1} parent=31 // pred_check
          %p289 = pneg %p288
        $region38: #{tpu_custom_call.1} parent=31 // pred_check_branch
          %291 = sbr.rel (%p289) target = $region40
        $region39: #{tpu_custom_call.1} parent=31 // pred_region
          %v292 = vld [vmem:[%s238] sm:$0xff]
          %v293 = vld [vmem:[%s238 + $0x8] sm:$0xff]
          %v294 = vld [vmem:[%s238 + $0x10] sm:$0xff]
          %v295 = vld [vmem:[%s238 + $0x18] sm:$0xff]
          %v296 = vld [vmem:[%s238 + $0x20] sm:$0xff]
          %v297 = vld [vmem:[%s238 + $0x28] sm:$0xff]
          %v298 = vld [vmem:[%s238 + $0x30] sm:$0xff]
          %v299 = vld [vmem:[%s238 + $0x38] sm:$0xff]
          %v300 = vld [vmem:[%s1] sm:$0xff]
          %v301 = vld [vmem:[%s1 + $0x8] sm:$0xff]
          %v302 = vld [vmem:[%s1 + $0x10] sm:$0xff]
          %v303 = vld [vmem:[%s1 + $0x18] sm:$0xff]
          %v304 = vld [vmem:[%s2] sm:$0x1]
          %v306 = vlaneseq
          %v307 = vshrl.u32 %v306, 7
          %v308 = vsub.s32 0, %v307
          %v309 = vrot.slane %v304, %v308
          %311 = vxpose.xlu0.b32.start [1/16] %v292, 128
          %312 = vxpose.xlu0.b32.cont [2/16] %v294, 128
          %313 = vxpose.xlu0.b32.cont [3/16] %v296, 128
          %314 = vxpose.xlu0.b32.cont [4/16] %v298, 128
          %315 = vxpose.xlu0.b32.cont [5/16] 0.0, 128
          %316 = vxpose.xlu0.b32.cont [6/16] 0.0, 128
          %317 = vxpose.xlu0.b32.cont [7/16] 0.0, 128
          %318 = vxpose.xlu0.b32.cont [8/16] 0.0, 128
          %319 = vxpose.xlu0.b32.cont [9/16] 0.0, 128
          %320 = vxpose.xlu0.b32.cont [10/16] 0.0, 128
          %321 = vxpose.xlu0.b32.cont [11/16] 0.0, 128
          %322 = vxpose.xlu0.b32.cont [12/16] 0.0, 128
          %323 = vxpose.xlu0.b32.cont [13/16] 0.0, 128
          %324 = vxpose.xlu0.b32.cont [14/16] 0.0, 128
          %325 = vxpose.xlu0.b32.cont [15/16] 0.0, 128
          %326 = vxpose.xlu0.b32.end [16/16] 0.0, 128
          %v327 = vpop.trf.xlu0
          %v328 = vpop.trf.xlu0
          %v329 = vpop.trf.xlu0
          %v330 = vpop.trf.xlu0
          %v331 = vpop.trf.xlu0
          %v332 = vpop.trf.xlu0
          %v333 = vpop.trf.xlu0
          %v334 = vpop.trf.xlu0
          %v335 = vpop.trf.xlu0
          %v336 = vpop.trf.xlu0
          %v337 = vpop.trf.xlu0
          %v338 = vpop.trf.xlu0
          %v339 = vpop.trf.xlu0
          %v340 = vpop.trf.xlu0
          %v341 = vpop.trf.xlu0
          %v342 = vpop.trf.xlu0
          %343 = vxpose.xlu0.b32.start [1/16] %v293, 128
          %344 = vxpose.xlu0.b32.cont [2/16] %v295, 128
          %345 = vxpose.xlu0.b32.cont [3/16] %v297, 128
          %346 = vxpose.xlu0.b32.cont [4/16] %v299, 128
          %347 = vxpose.xlu0.b32.cont [5/16] 0.0, 128
          %348 = vxpose.xlu0.b32.cont [6/16] 0.0, 128
          %349 = vxpose.xlu0.b32.cont [7/16] 0.0, 128
          %350 = vxpose.xlu0.b32.cont [8/16] 0.0, 128
          %351 = vxpose.xlu0.b32.cont [9/16] 0.0, 128
          %352 = vxpose.xlu0.b32.cont [10/16] 0.0, 128
          %353 = vxpose.xlu0.b32.cont [11/16] 0.0, 128
          %354 = vxpose.xlu0.b32.cont [12/16] 0.0, 128
          %355 = vxpose.xlu0.b32.cont [13/16] 0.0, 128
          %356 = vxpose.xlu0.b32.cont [14/16] 0.0, 128
          %357 = vxpose.xlu0.b32.cont [15/16] 0.0, 128
          %358 = vxpose.xlu0.b32.end [16/16] 0.0, 128
          %v359 = vpop.trf.xlu0
          %v360 = vpop.trf.xlu0
          %v361 = vpop.trf.xlu0
          %v362 = vpop.trf.xlu0
          %v363 = vpop.trf.xlu0
          %v364 = vpop.trf.xlu0
          %v365 = vpop.trf.xlu0
          %v366 = vpop.trf.xlu0
          %v367 = vpop.trf.xlu0
          %v368 = vpop.trf.xlu0
          %v369 = vpop.trf.xlu0
          %v370 = vpop.trf.xlu0
          %v371 = vpop.trf.xlu0
          %v372 = vpop.trf.xlu0
          %v373 = vpop.trf.xlu0
          %v374 = vpop.trf.xlu0
          %vm375 = vcmask 261120
          %v377 = vsel %vm375, %v327, 0
          %v380 = vsel %vm375, %v328, 0
          %v383 = vsel %vm375, %v329, 0
          %v386 = vsel %vm375, %v330, 0
          %v389 = vsel %vm375, %v331, 0
          %v392 = vsel %vm375, %v332, 0
          %v395 = vsel %vm375, %v333, 0
          %v398 = vsel %vm375, %v334, 0
          %v401 = vsel %vm375, %v335, 0
          %v404 = vsel %vm375, %v336, 0
          %v407 = vsel %vm375, %v337, 0
          %v410 = vsel %vm375, %v338, 0
          %v413 = vsel %vm375, %v339, 0
          %v416 = vsel %vm375, %v340, 0
          %v419 = vsel %vm375, %v341, 0
          %v422 = vsel %vm375, %v342, 0
          %v425 = vsel %vm375, %v359, 0
          %v428 = vsel %vm375, %v360, 0
          %v431 = vsel %vm375, %v361, 0
          %v434 = vsel %vm375, %v362, 0
          %v437 = vsel %vm375, %v363, 0
          %v440 = vsel %vm375, %v364, 0
          %v443 = vsel %vm375, %v365, 0
          %v446 = vsel %vm375, %v366, 0
          %v449 = vsel %vm375, %v367, 0
          %v452 = vsel %vm375, %v368, 0
          %v455 = vsel %vm375, %v369, 0
          %v458 = vsel %vm375, %v370, 0
          %v461 = vsel %vm375, %v371, 0
          %v464 = vsel %vm375, %v372, 0
          %v467 = vsel %vm375, %v373, 0
          %v470 = vsel %vm375, %v374, 0
          %472 = vmatprep.subr.mxu0 0.0
          %473 = vmatpush1.msra.mxu0 %v300
          %474 = vmatprep.subr.mxu0 0.0
          %475 = vmatpush1.msra.mxu0 %v301
          %476 = vmatprep.subr.mxu0 0.0
          %477 = vmatpush1.msra.mxu0 %v302
          %478 = vmatprep.subr.mxu0 0.0
          %479 = vmatpush1.msra.mxu0 %v303
          %480 = vmatprep.subr.mxu0 0.0
          %481 = vmatpush1.msra.mxu0 0.0
          %482 = vmatprep.subr.mxu0 0.0
          %483 = vmatpush1.msra.mxu0 0.0
          %484 = vmatprep.subr.mxu0 0.0
          %485 = vmatpush1.msra.mxu0 0.0
          %486 = vmatprep.subr.mxu0 0.0
          %487 = vmatpush1.msra.mxu0 0.0
          %488 = vmatprep.subr.mxu0 0.0
          %489 = vmatpush1.msra.mxu0 0.0
          %490 = vmatprep.subr.mxu0 0.0
          %491 = vmatpush1.msra.mxu0 0.0
          %492 = vmatprep.subr.mxu0 0.0
          %493 = vmatpush1.msra.mxu0 0.0
          %494 = vmatprep.subr.mxu0 0.0
          %495 = vmatpush1.msra.mxu0 0.0
          %496 = vmatprep.subr.mxu0 0.0
          %497 = vmatpush1.msra.mxu0 0.0
          %498 = vmatprep.subr.mxu0 0.0
          %499 = vmatpush1.msra.mxu0 0.0
          %500 = vmatprep.subr.mxu0 0.0
          %501 = vmatpush1.msra.mxu0 0.0
          %502 = vmatprep.subr.mxu0 0.0
          %503 = vmatpush1.msra.mxu0 0.0
          %504 = vmatprep.subr.mxu0 0.0
          %505 = vmatpush1.msra.mxu0 0.0
          %506 = vmatprep.subr.mxu0 0.0
          %507 = vmatpush1.msra.mxu0 0.0
          %508 = vmatprep.subr.mxu0 0.0
          %509 = vmatpush1.msra.mxu0 0.0
          %510 = vmatprep.subr.mxu0 0.0
          %511 = vmatpush1.msra.mxu0 0.0
          %512 = vmatprep.subr.mxu0 0.0
          %513 = vmatpush1.msra.mxu0 0.0
          %514 = vmatprep.subr.mxu0 0.0
          %515 = vmatpush1.msra.mxu0 0.0
          %516 = vmatprep.subr.mxu0 0.0
          %517 = vmatpush1.msra.mxu0 0.0
          %518 = vmatprep.subr.mxu0 0.0
          %519 = vmatpush1.msra.mxu0 0.0
          %520 = vmatprep.subr.mxu0 0.0
          %521 = vmatpush1.msra.mxu0 0.0
          %522 = vmatprep.subr.mxu0 0.0
          %523 = vmatpush1.msra.mxu0 0.0
          %524 = vmatprep.subr.mxu0 0.0
          %525 = vmatpush1.msra.mxu0 0.0
          %526 = vmatprep.subr.mxu0 0.0
          %527 = vmatpush1.msra.mxu0 0.0
          %528 = vmatprep.subr.mxu0 0.0
          %529 = vmatpush1.msra.mxu0 0.0
          %530 = vmatprep.subr.mxu0 0.0
          %531 = vmatpush1.msra.mxu0 0.0
          %532 = vmatprep.subr.mxu0 0.0
          %533 = vmatpush1.msra.mxu0 0.0
          %534 = vmatprep.subr.mxu0 0.0
          %535 = vmatpush1.msra.mxu0 0.0
          %536 = vmatprep.mubr.f32.mxu0 0.0
          %537 = vmatmul.mubr.f32.gmra.mrb[0].mxu0 %v377
          %v538 = vpop.f32.mrb[0].mxu0
          %v539 = vadd.f32 %v309, %v538
          %v540 = vpop.f32.mrb[0].mxu0
          %541 = vmatprep.mubr.f32.mxu0 0.0
          %542 = vmatmul.mubr.f32.gmra.mrb[0].mxu0 %v380
          %v543 = vpop.f32.mrb[0].mxu0
          %v544 = vadd.f32 %v309, %v543
          %v545 = vpop.f32.mrb[0].mxu0
          %546 = vmatprep.mubr.f32.mxu0 0.0
          %547 = vmatmul.mubr.f32.gmra.mrb[0].mxu0 %v383
          %v548 = vpop.f32.mrb[0].mxu0
          %v549 = vadd.f32 %v309, %v548
          %v550 = vpop.f32.mrb[0].mxu0
          %551 = vmatprep.mubr.f32.mxu0 0.0
          %552 = vmatmul.mubr.f32.gmra.mrb[0].mxu0 %v386
          %v553 = vpop.f32.mrb[0].mxu0
          %v554 = vadd.f32 %v309, %v553
          %v555 = vpop.f32.mrb[0].mxu0
          %556 = vmatprep.mubr.f32.mxu0 0.0
          %557 = vmatmul.mubr.f32.gmra.mrb[0].mxu0 %v389
          %v558 = vpop.f32.mrb[0].mxu0
          %v559 = vadd.f32 %v309, %v558
          %v560 = vpop.f32.mrb[0].mxu0
          %561 = vmatprep.mubr.f32.mxu0 0.0
          %562 = vmatmul.mubr.f32.gmra.mrb[0].mxu0 %v392
          %v563 = vpop.f32.mrb[0].mxu0
          %v564 = vadd.f32 %v309, %v563
          %v565 = vpop.f32.mrb[0].mxu0
          %566 = vmatprep.mubr.f32.mxu0 0.0
          %567 = vmatmul.mubr.f32.gmra.mrb[0].mxu0 %v395
          %v568 = vpop.f32.mrb[0].mxu0
          %v569 = vadd.f32 %v309, %v568
          %v570 = vpop.f32.mrb[0].mxu0
          %571 = vmatprep.mubr.f32.mxu0 0.0
          %572 = vmatmul.mubr.f32.gmra.mrb[0].mxu0 %v398
          %v573 = vpop.f32.mrb[0].mxu0
          %v574 = vadd.f32 %v309, %v573
          %v575 = vpop.f32.mrb[0].mxu0
          %576 = vmatprep.mubr.f32.mxu0 0.0
          %577 = vmatmul.mubr.f32.gmra.mrb[0].mxu0 %v401
          %v578 = vpop.f32.mrb[0].mxu0
          %v579 = vadd.f32 %v309, %v578
          %v580 = vpop.f32.mrb[0].mxu0
          %581 = vmatprep.mubr.f32.mxu0 0.0
          %582 = vmatmul.mubr.f32.gmra.mrb[0].mxu0 %v404
          %v583 = vpop.f32.mrb[0].mxu0
          %v584 = vadd.f32 %v309, %v583
          %v585 = vpop.f32.mrb[0].mxu0
          %586 = vmatprep.mubr.f32.mxu0 0.0
          %587 = vmatmul.mubr.f32.gmra.mrb[0].mxu0 %v407
          %v588 = vpop.f32.mrb[0].mxu0
          %v589 = vadd.f32 %v309, %v588
          %v590 = vpop.f32.mrb[0].mxu0
          %591 = vmatprep.mubr.f32.mxu0 0.0
          %592 = vmatmul.mubr.f32.gmra.mrb[0].mxu0 %v410
          %v593 = vpop.f32.mrb[0].mxu0
          %v594 = vadd.f32 %v309, %v593
          %v595 = vpop.f32.mrb[0].mxu0
          %596 = vmatprep.mubr.f32.mxu0 0.0
          %597 = vmatmul.mubr.f32.gmra.mrb[0].mxu0 %v413
          %v598 = vpop.f32.mrb[0].mxu0
          %v599 = vadd.f32 %v309, %v598
          %v600 = vpop.f32.mrb[0].mxu0
          %601 = vmatprep.mubr.f32.mxu0 0.0
          %602 = vmatmul.mubr.f32.gmra.mrb[0].mxu0 %v416
          %v603 = vpop.f32.mrb[0].mxu0
          %v604 = vadd.f32 %v309, %v603
          %v605 = vpop.f32.mrb[0].mxu0
          %606 = vmatprep.mubr.f32.mxu0 0.0
          %607 = vmatmul.mubr.f32.gmra.mrb[0].mxu0 %v419
          %v608 = vpop.f32.mrb[0].mxu0
          %v609 = vadd.f32 %v309, %v608
          %v610 = vpop.f32.mrb[0].mxu0
          %611 = vmatprep.mubr.f32.mxu0 0.0
          %612 = vmatmul.mubr.f32.gmra.mrb[0].mxu0 %v422
          %v613 = vpop.f32.mrb[0].mxu0
          %v614 = vadd.f32 %v309, %v613
          %v615 = vpop.f32.mrb[0].mxu0
          %616 = vmatprep.mubr.f32.mxu0 0.0
          %617 = vmatmul.mubr.f32.gmra.mrb[0].mxu0 %v425
          %v618 = vpop.f32.mrb[0].mxu0
          %v619 = vadd.f32 %v309, %v618
          %v620 = vpop.f32.mrb[0].mxu0
          %621 = vmatprep.mubr.f32.mxu0 0.0
          %622 = vmatmul.mubr.f32.gmra.mrb[0].mxu0 %v428
          %v623 = vpop.f32.mrb[0].mxu0
          %v624 = vadd.f32 %v309, %v623
          %v625 = vpop.f32.mrb[0].mxu0
          %626 = vmatprep.mubr.f32.mxu0 0.0
          %627 = vmatmul.mubr.f32.gmra.mrb[0].mxu0 %v431
          %v628 = vpop.f32.mrb[0].mxu0
          %v629 = vadd.f32 %v309, %v628
          %v630 = vpop.f32.mrb[0].mxu0
          %631 = vmatprep.mubr.f32.mxu0 0.0
          %632 = vmatmul.mubr.f32.gmra.mrb[0].mxu0 %v434
          %v633 = vpop.f32.mrb[0].mxu0
          %v634 = vadd.f32 %v309, %v633
          %v635 = vpop.f32.mrb[0].mxu0
          %636 = vmatprep.mubr.f32.mxu0 0.0
          %637 = vmatmul.mubr.f32.gmra.mrb[0].mxu0 %v437
          %v638 = vpop.f32.mrb[0].mxu0
          %v639 = vadd.f32 %v309, %v638
          %v640 = vpop.f32.mrb[0].mxu0
          %641 = vmatprep.mubr.f32.mxu0 0.0
          %642 = vmatmul.mubr.f32.gmra.mrb[0].mxu0 %v440
          %v643 = vpop.f32.mrb[0].mxu0
          %v644 = vadd.f32 %v309, %v643
          %v645 = vpop.f32.mrb[0].mxu0
          %646 = vmatprep.mubr.f32.mxu0 0.0
          %647 = vmatmul.mubr.f32.gmra.mrb[0].mxu0 %v443
          %v648 = vpop.f32.mrb[0].mxu0
          %v649 = vadd.f32 %v309, %v648
          %v650 = vpop.f32.mrb[0].mxu0
          %651 = vmatprep.mubr.f32.mxu0 0.0
          %652 = vmatmul.mubr.f32.gmra.mrb[0].mxu0 %v446
          %v653 = vpop.f32.mrb[0].mxu0
          %v654 = vadd.f32 %v309, %v653
          %v655 = vpop.f32.mrb[0].mxu0
          %656 = vmatprep.mubr.f32.mxu0 0.0
          %657 = vmatmul.mubr.f32.gmra.mrb[0].mxu0 %v449
          %v658 = vpop.f32.mrb[0].mxu0
          %v659 = vadd.f32 %v309, %v658
          %v660 = vpop.f32.mrb[0].mxu0
          %661 = vmatprep.mubr.f32.mxu0 0.0
          %662 = vmatmul.mubr.f32.gmra.mrb[0].mxu0 %v452
          %v663 = vpop.f32.mrb[0].mxu0
          %v664 = vadd.f32 %v309, %v663
          %v665 = vpop.f32.mrb[0].mxu0
          %666 = vmatprep.mubr.f32.mxu0 0.0
          %667 = vmatmul.mubr.f32.gmra.mrb[0].mxu0 %v455
          %v668 = vpop.f32.mrb[0].mxu0
          %v669 = vadd.f32 %v309, %v668
          %v670 = vpop.f32.mrb[0].mxu0
          %671 = vmatprep.mubr.f32.mxu0 0.0
          %672 = vmatmul.mubr.f32.gmra.mrb[0].mxu0 %v458
          %v673 = vpop.f32.mrb[0].mxu0
          %v674 = vadd.f32 %v309, %v673
          %v675 = vpop.f32.mrb[0].mxu0
          %676 = vmatprep.mubr.f32.mxu0 0.0
          %677 = vmatmul.mubr.f32.gmra.mrb[0].mxu0 %v461
          %v678 = vpop.f32.mrb[0].mxu0
          %v679 = vadd.f32 %v309, %v678
          %v680 = vpop.f32.mrb[0].mxu0
          %681 = vmatprep.mubr.f32.mxu0 0.0
          %682 = vmatmul.mubr.f32.gmra.mrb[0].mxu0 %v464
          %v683 = vpop.f32.mrb[0].mxu0
          %v684 = vadd.f32 %v309, %v683
          %v685 = vpop.f32.mrb[0].mxu0
          %686 = vmatprep.mubr.f32.mxu0 0.0
          %687 = vmatmul.mubr.f32.gmra.mrb[0].mxu0 %v467
          %v688 = vpop.f32.mrb[0].mxu0
          %v689 = vadd.f32 %v309, %v688
          %v690 = vpop.f32.mrb[0].mxu0
          %691 = vmatprep.mubr.f32.mxu0 0.0
          %692 = vmatmul.mubr.f32.gmra.mrb[0].mxu0 %v470
          %v693 = vpop.f32.mrb[0].mxu0
          %v694 = vadd.f32 %v309, %v693
          %v695 = vpop.f32.mrb[0].mxu0
          %696 = vdwg.mxu0
          %vm697 = vcmask 64512
          %698 = vst.msk [vmem:[#allocation2] sm:$0xff] %vm697, %v539
          %699 = vst.msk [vmem:[#allocation2 + $0x8] sm:$0xff] %vm697, %v544
          %700 = vst.msk [vmem:[#allocation2 + $0x10] sm:$0xff] %vm697, %v549
          %701 = vst.msk [vmem:[#allocation2 + $0x18] sm:$0xff] %vm697, %v554
          %702 = vst.msk [vmem:[#allocation2 + $0x20] sm:$0xff] %vm697, %v559
          %703 = vst.msk [vmem:[#allocation2 + $0x28] sm:$0xff] %vm697, %v564
          %704 = vst.msk [vmem:[#allocation2 + $0x30] sm:$0xff] %vm697, %v569
          %705 = vst.msk [vmem:[#allocation2 + $0x38] sm:$0xff] %vm697, %v574
          %706 = vst.msk [vmem:[#allocation2 + $0x40] sm:$0xff] %vm697, %v579
          %707 = vst.msk [vmem:[#allocation2 + $0x48] sm:$0xff] %vm697, %v584
          %708 = vst.msk [vmem:[#allocation2 + $0x50] sm:$0xff] %vm697, %v589
          %709 = vst.msk [vmem:[#allocation2 + $0x58] sm:$0xff] %vm697, %v594
          %710 = vst.msk [vmem:[#allocation2 + $0x60] sm:$0xff] %vm697, %v599
          %711 = vst.msk [vmem:[#allocation2 + $0x68] sm:$0xff] %vm697, %v604
          %712 = vst.msk [vmem:[#allocation2 + $0x70] sm:$0xff] %vm697, %v609
          %713 = vst.msk [vmem:[#allocation2 + $0x78] sm:$0xff] %vm697, %v614
          %714 = vst.msk [vmem:[#allocation2 + $0x80] sm:$0xff] %vm697, %v619
          %715 = vst.msk [vmem:[#allocation2 + $0x88] sm:$0xff] %vm697, %v624
          %716 = vst.msk [vmem:[#allocation2 + $0x90] sm:$0xff] %vm697, %v629
          %717 = vst.msk [vmem:[#allocation2 + $0x98] sm:$0xff] %vm697, %v634
          %718 = vst.msk [vmem:[#allocation2 + $0xa0] sm:$0xff] %vm697, %v639
          %719 = vst.msk [vmem:[#allocation2 + $0xa8] sm:$0xff] %vm697, %v644
          %720 = vst.msk [vmem:[#allocation2 + $0xb0] sm:$0xff] %vm697, %v649
          %721 = vst.msk [vmem:[#allocation2 + $0xb8] sm:$0xff] %vm697, %v654
          %722 = vst.msk [vmem:[#allocation2 + $0xc0] sm:$0xff] %vm697, %v659
          %723 = vst.msk [vmem:[#allocation2 + $0xc8] sm:$0xff] %vm697, %v664
          %724 = vst.msk [vmem:[#allocation2 + $0xd0] sm:$0xff] %vm697, %v669
          %725 = vst.msk [vmem:[#allocation2 + $0xd8] sm:$0xff] %vm697, %v674
          %726 = vst.msk [vmem:[#allocation2 + $0xe0] sm:$0xff] %vm697, %v679
          %727 = vst.msk [vmem:[#allocation2 + $0xe8] sm:$0xff] %vm697, %v684
          %728 = vst.msk [vmem:[#allocation2 + $0xf0] sm:$0xff] %vm697, %v689
          %729 = vst.msk [vmem:[#allocation2 + $0xf8] sm:$0xff] %vm697, %v694
          %762 = vrot.lane.b32.xlu0 %v539, 120
          %v763 = vpop.permute.xlu0 %762
          %764 = vrot.lane.b32.xlu0 %v544, 120
          %v765 = vpop.permute.xlu0 %764
          %766 = vrot.lane.b32.xlu0 %v549, 120
          %v767 = vpop.permute.xlu0 %766
          %768 = vrot.lane.b32.xlu0 %v554, 120
          %v769 = vpop.permute.xlu0 %768
          %770 = vrot.lane.b32.xlu0 %v559, 120
          %v771 = vpop.permute.xlu0 %770
          %772 = vrot.lane.b32.xlu0 %v564, 120
          %v773 = vpop.permute.xlu0 %772
          %774 = vrot.lane.b32.xlu0 %v569, 120
          %v775 = vpop.permute.xlu0 %774
          %776 = vrot.lane.b32.xlu0 %v574, 120
          %v777 = vpop.permute.xlu0 %776
          %778 = vrot.lane.b32.xlu0 %v579, 120
          %v779 = vpop.permute.xlu0 %778
          %780 = vrot.lane.b32.xlu0 %v584, 120
          %v781 = vpop.permute.xlu0 %780
          %782 = vrot.lane.b32.xlu0 %v589, 120
          %v783 = vpop.permute.xlu0 %782
          %784 = vrot.lane.b32.xlu0 %v594, 120
          %v785 = vpop.permute.xlu0 %784
          %786 = vrot.lane.b32.xlu0 %v599, 120
          %v787 = vpop.permute.xlu0 %786
          %788 = vrot.lane.b32.xlu0 %v604, 120
          %v789 = vpop.permute.xlu0 %788
          %790 = vrot.lane.b32.xlu0 %v609, 120
          %v791 = vpop.permute.xlu0 %790
          %792 = vrot.lane.b32.xlu0 %v614, 120
          %v793 = vpop.permute.xlu0 %792
          %794 = vrot.lane.b32.xlu0 %v619, 120
          %v795 = vpop.permute.xlu0 %794
          %796 = vrot.lane.b32.xlu0 %v624, 120
          %v797 = vpop.permute.xlu0 %796
          %798 = vrot.lane.b32.xlu0 %v629, 120
          %v799 = vpop.permute.xlu0 %798
          %800 = vrot.lane.b32.xlu0 %v634, 120
          %v801 = vpop.permute.xlu0 %800
          %802 = vrot.lane.b32.xlu0 %v639, 120
          %v803 = vpop.permute.xlu0 %802
          %804 = vrot.lane.b32.xlu0 %v644, 120
          %v805 = vpop.permute.xlu0 %804
          %806 = vrot.lane.b32.xlu0 %v649, 120
          %v807 = vpop.permute.xlu0 %806
          %808 = vrot.lane.b32.xlu0 %v654, 120
          %v809 = vpop.permute.xlu0 %808
          %810 = vrot.lane.b32.xlu0 %v659, 120
          %v811 = vpop.permute.xlu0 %810
          %812 = vrot.lane.b32.xlu0 %v664, 120
          %v813 = vpop.permute.xlu0 %812
          %814 = vrot.lane.b32.xlu0 %v669, 120
          %v815 = vpop.permute.xlu0 %814
          %816 = vrot.lane.b32.xlu0 %v674, 120
          %v817 = vpop.permute.xlu0 %816
          %818 = vrot.lane.b32.xlu0 %v679, 120
          %v819 = vpop.permute.xlu0 %818
          %820 = vrot.lane.b32.xlu0 %v684, 120
          %v821 = vpop.permute.xlu0 %820
          %822 = vrot.lane.b32.xlu0 %v689, 120
          %v823 = vpop.permute.xlu0 %822
          %824 = vrot.lane.b32.xlu0 %v694, 120
          %v825 = vpop.permute.xlu0 %824
          %858 = vst.msk [vmem:[#allocation3] sm:$0xff] %vm697, %v763
          %859 = vst.msk [vmem:[#allocation3 + $0x8] sm:$0xff] %vm697, %v765
          %860 = vst.msk [vmem:[#allocation3 + $0x10] sm:$0xff] %vm697, %v767
          %861 = vst.msk [vmem:[#allocation3 + $0x18] sm:$0xff] %vm697, %v769
          %862 = vst.msk [vmem:[#allocation3 + $0x20] sm:$0xff] %vm697, %v771
          %863 = vst.msk [vmem:[#allocation3 + $0x28] sm:$0xff] %vm697, %v773
          %864 = vst.msk [vmem:[#allocation3 + $0x30] sm:$0xff] %vm697, %v775
          %865 = vst.msk [vmem:[#allocation3 + $0x38] sm:$0xff] %vm697, %v777
          %866 = vst.msk [vmem:[#allocation3 + $0x40] sm:$0xff] %vm697, %v779
          %867 = vst.msk [vmem:[#allocation3 + $0x48] sm:$0xff] %vm697, %v781
          %868 = vst.msk [vmem:[#allocation3 + $0x50] sm:$0xff] %vm697, %v783
          %869 = vst.msk [vmem:[#allocation3 + $0x58] sm:$0xff] %vm697, %v785
          %870 = vst.msk [vmem:[#allocation3 + $0x60] sm:$0xff] %vm697, %v787
          %871 = vst.msk [vmem:[#allocation3 + $0x68] sm:$0xff] %vm697, %v789
          %872 = vst.msk [vmem:[#allocation3 + $0x70] sm:$0xff] %vm697, %v791
          %873 = vst.msk [vmem:[#allocation3 + $0x78] sm:$0xff] %vm697, %v793
          %874 = vst.msk [vmem:[#allocation3 + $0x80] sm:$0xff] %vm697, %v795
          %875 = vst.msk [vmem:[#allocation3 + $0x88] sm:$0xff] %vm697, %v797
          %876 = vst.msk [vmem:[#allocation3 + $0x90] sm:$0xff] %vm697, %v799
          %877 = vst.msk [vmem:[#allocation3 + $0x98] sm:$0xff] %vm697, %v801
          %878 = vst.msk [vmem:[#allocation3 + $0xa0] sm:$0xff] %vm697, %v803
          %879 = vst.msk [vmem:[#allocation3 + $0xa8] sm:$0xff] %vm697, %v805
          %880 = vst.msk [vmem:[#allocation3 + $0xb0] sm:$0xff] %vm697, %v807
          %881 = vst.msk [vmem:[#allocation3 + $0xb8] sm:$0xff] %vm697, %v809
          %882 = vst.msk [vmem:[#allocation3 + $0xc0] sm:$0xff] %vm697, %v811
          %883 = vst.msk [vmem:[#allocation3 + $0xc8] sm:$0xff] %vm697, %v813
          %884 = vst.msk [vmem:[#allocation3 + $0xd0] sm:$0xff] %vm697, %v815
          %885 = vst.msk [vmem:[#allocation3 + $0xd8] sm:$0xff] %vm697, %v817
          %886 = vst.msk [vmem:[#allocation3 + $0xe0] sm:$0xff] %vm697, %v819
          %887 = vst.msk [vmem:[#allocation3 + $0xe8] sm:$0xff] %vm697, %v821
          %888 = vst.msk [vmem:[#allocation3 + $0xf0] sm:$0xff] %vm697, %v823
          %889 = vst.msk [vmem:[#allocation3 + $0xf8] sm:$0xff] %vm697, %v825
          %890 = vrot.lane.b32.xlu0 %v539, 112
          %v891 = vpop.permute.xlu0 %890
          %892 = vrot.lane.b32.xlu0 %v544, 112
          %v893 = vpop.permute.xlu0 %892
          %894 = vrot.lane.b32.xlu0 %v549, 112
          %v895 = vpop.permute.xlu0 %894
          %896 = vrot.lane.b32.xlu0 %v554, 112
          %v897 = vpop.permute.xlu0 %896
          %898 = vrot.lane.b32.xlu0 %v559, 112
          %v899 = vpop.permute.xlu0 %898
          %900 = vrot.lane.b32.xlu0 %v564, 112
          %v901 = vpop.permute.xlu0 %900
          %902 = vrot.lane.b32.xlu0 %v569, 112
          %v903 = vpop.permute.xlu0 %902
          %904 = vrot.lane.b32.xlu0 %v574, 112
          %v905 = vpop.permute.xlu0 %904
          %906 = vrot.lane.b32.xlu0 %v579, 112
          %v907 = vpop.permute.xlu0 %906
          %908 = vrot.lane.b32.xlu0 %v584, 112
          %v909 = vpop.permute.xlu0 %908
          %910 = vrot.lane.b32.xlu0 %v589, 112
          %v911 = vpop.permute.xlu0 %910
          %912 = vrot.lane.b32.xlu0 %v594, 112
          %v913 = vpop.permute.xlu0 %912
          %914 = vrot.lane.b32.xlu0 %v599, 112
          %v915 = vpop.permute.xlu0 %914
          %916 = vrot.lane.b32.xlu0 %v604, 112
          %v917 = vpop.permute.xlu0 %916
          %918 = vrot.lane.b32.xlu0 %v609, 112
          %v919 = vpop.permute.xlu0 %918
          %920 = vrot.lane.b32.xlu0 %v614, 112
          %v921 = vpop.permute.xlu0 %920
          %922 = vrot.lane.b32.xlu0 %v619, 112
          %v923 = vpop.permute.xlu0 %922
          %924 = vrot.lane.b32.xlu0 %v624, 112
          %v925 = vpop.permute.xlu0 %924
          %926 = vrot.lane.b32.xlu0 %v629, 112
          %v927 = vpop.permute.xlu0 %926
          %928 = vrot.lane.b32.xlu0 %v634, 112
          %v929 = vpop.permute.xlu0 %928
          %930 = vrot.lane.b32.xlu0 %v639, 112
          %v931 = vpop.permute.xlu0 %930
          %932 = vrot.lane.b32.xlu0 %v644, 112
          %v933 = vpop.permute.xlu0 %932
          %934 = vrot.lane.b32.xlu0 %v649, 112
          %v935 = vpop.permute.xlu0 %934
          %936 = vrot.lane.b32.xlu0 %v654, 112
          %v937 = vpop.permute.xlu0 %936
          %938 = vrot.lane.b32.xlu0 %v659, 112
          %v939 = vpop.permute.xlu0 %938
          %940 = vrot.lane.b32.xlu0 %v664, 112
          %v941 = vpop.permute.xlu0 %940
          %942 = vrot.lane.b32.xlu0 %v669, 112
          %v943 = vpop.permute.xlu0 %942
          %944 = vrot.lane.b32.xlu0 %v674, 112
          %v945 = vpop.permute.xlu0 %944
          %946 = vrot.lane.b32.xlu0 %v679, 112
          %v947 = vpop.permute.xlu0 %946
          %948 = vrot.lane.b32.xlu0 %v684, 112
          %v949 = vpop.permute.xlu0 %948
          %950 = vrot.lane.b32.xlu0 %v689, 112
          %v951 = vpop.permute.xlu0 %950
          %952 = vrot.lane.b32.xlu0 %v694, 112
          %v953 = vpop.permute.xlu0 %952
          %986 = vst.msk [vmem:[#allocation4] sm:$0xff] %vm697, %v891
          %987 = vst.msk [vmem:[#allocation4 + $0x8] sm:$0xff] %vm697, %v893
          %988 = vst.msk [vmem:[#allocation4 + $0x10] sm:$0xff] %vm697, %v895
          %989 = vst.msk [vmem:[#allocation4 + $0x18] sm:$0xff] %vm697, %v897
          %990 = vst.msk [vmem:[#allocation4 + $0x20] sm:$0xff] %vm697, %v899
          %991 = vst.msk [vmem:[#allocation4 + $0x28] sm:$0xff] %vm697, %v901
          %992 = vst.msk [vmem:[#allocation4 + $0x30] sm:$0xff] %vm697, %v903
          %993 = vst.msk [vmem:[#allocation4 + $0x38] sm:$0xff] %vm697, %v905
          %994 = vst.msk [vmem:[#allocation4 + $0x40] sm:$0xff] %vm697, %v907
          %995 = vst.msk [vmem:[#allocation4 + $0x48] sm:$0xff] %vm697, %v909
          %996 = vst.msk [vmem:[#allocation4 + $0x50] sm:$0xff] %vm697, %v911
          %997 = vst.msk [vmem:[#allocation4 + $0x58] sm:$0xff] %vm697, %v913
          %998 = vst.msk [vmem:[#allocation4 + $0x60] sm:$0xff] %vm697, %v915
          %999 = vst.msk [vmem:[#allocation4 + $0x68] sm:$0xff] %vm697, %v917
          %1000 = vst.msk [vmem:[#allocation4 + $0x70] sm:$0xff] %vm697, %v919
          %1001 = vst.msk [vmem:[#allocation4 + $0x78] sm:$0xff] %vm697, %v921
          %1002 = vst.msk [vmem:[#allocation4 + $0x80] sm:$0xff] %vm697, %v923
          %1003 = vst.msk [vmem:[#allocation4 + $0x88] sm:$0xff] %vm697, %v925
          %1004 = vst.msk [vmem:[#allocation4 + $0x90] sm:$0xff] %vm697, %v927
          %1005 = vst.msk [vmem:[#allocation4 + $0x98] sm:$0xff] %vm697, %v929
          %1006 = vst.msk [vmem:[#allocation4 + $0xa0] sm:$0xff] %vm697, %v931
          %1007 = vst.msk [vmem:[#allocation4 + $0xa8] sm:$0xff] %vm697, %v933
          %1008 = vst.msk [vmem:[#allocation4 + $0xb0] sm:$0xff] %vm697, %v935
          %1009 = vst.msk [vmem:[#allocation4 + $0xb8] sm:$0xff] %vm697, %v937
          %1010 = vst.msk [vmem:[#allocation4 + $0xc0] sm:$0xff] %vm697, %v939
          %1011 = vst.msk [vmem:[#allocation4 + $0xc8] sm:$0xff] %vm697, %v941
          %1012 = vst.msk [vmem:[#allocation4 + $0xd0] sm:$0xff] %vm697, %v943
          %1013 = vst.msk [vmem:[#allocation4 + $0xd8] sm:$0xff] %vm697, %v945
          %1014 = vst.msk [vmem:[#allocation4 + $0xe0] sm:$0xff] %vm697, %v947
          %1015 = vst.msk [vmem:[#allocation4 + $0xe8] sm:$0xff] %vm697, %v949
          %1016 = vst.msk [vmem:[#allocation4 + $0xf0] sm:$0xff] %vm697, %v951
          %1017 = vst.msk [vmem:[#allocation4 + $0xf8] sm:$0xff] %vm697, %v953
          %1018 = vst.msk [vmem:[%s271] sm:$0xff] %vm697, 0.0
          %vm1019 = vcmask 57344
          %1020 = vst.msk [vmem:[%s277] sm:$0x1] %vm1019, 0.0
        $region40: #{tpu_custom_call.1} parent=31 // pred_fallthru
          _
        %s1021 = smul.u32 %s31, 128
        %s1022 = scalar_lea.vmem [#allocation2], %s1021
        %v1023 = vld [vmem:[%s1022] sm:$0xff]
        %v1024 = vld [vmem:[%s1022 + $0x8] sm:$0xff]
        %v1025 = vld [vmem:[%s1022 + $0x10] sm:$0xff]
        %v1026 = vld [vmem:[%s1022 + $0x18] sm:$0xff]
        %v1027 = vld [vmem:[%s1022 + $0x20] sm:$0xff]
        %v1028 = vld [vmem:[%s1022 + $0x28] sm:$0xff]
        %v1029 = vld [vmem:[%s1022 + $0x30] sm:$0xff]
        %v1030 = vld [vmem:[%s1022 + $0x38] sm:$0xff]
        %v1031 = vld [vmem:[%s1022 + $0x40] sm:$0xff]
        %v1032 = vld [vmem:[%s1022 + $0x48] sm:$0xff]
        %v1033 = vld [vmem:[%s1022 + $0x50] sm:$0xff]
        %v1034 = vld [vmem:[%s1022 + $0x58] sm:$0xff]
        %v1035 = vld [vmem:[%s1022 + $0x60] sm:$0xff]
        %v1036 = vld [vmem:[%s1022 + $0x68] sm:$0xff]
        %v1037 = vld [vmem:[%s1022 + $0x70] sm:$0xff]
        %v1038 = vld [vmem:[%s1022 + $0x78] sm:$0xff]
        %v1039 = vld [vmem:[#allocation3] sm:$0xff]
        %v1040 = vld [vmem:[#allocation3 + $0x8] sm:$0xff]
        %v1041 = vld [vmem:[#allocation3 + $0x10] sm:$0xff]
        %v1042 = vld [vmem:[#allocation3 + $0x18] sm:$0xff]
        %v1043 = vld [vmem:[#allocation3 + $0x20] sm:$0xff]
        %v1044 = vld [vmem:[#allocation3 + $0x28] sm:$0xff]
        %v1045 = vld [vmem:[#allocation3 + $0x30] sm:$0xff]
        %v1046 = vld [vmem:[#allocation3 + $0x38] sm:$0xff]
        %v1047 = vld [vmem:[#allocation3 + $0x40] sm:$0xff]
        %v1048 = vld [vmem:[#allocation3 + $0x48] sm:$0xff]
        %v1049 = vld [vmem:[#allocation3 + $0x50] sm:$0xff]
        %v1050 = vld [vmem:[#allocation3 + $0x58] sm:$0xff]
        %v1051 = vld [vmem:[#allocation3 + $0x60] sm:$0xff]
        %v1052 = vld [vmem:[#allocation3 + $0x68] sm:$0xff]
        %v1053 = vld [vmem:[#allocation3 + $0x70] sm:$0xff]
        %v1054 = vld [vmem:[#allocation3 + $0x78] sm:$0xff]
        %v1055 = vld [vmem:[#allocation3 + $0x80] sm:$0xff]
        %v1056 = vld [vmem:[#allocation3 + $0x88] sm:$0xff]
        %v1057 = vld [vmem:[#allocation3 + $0x90] sm:$0xff]
        %v1058 = vld [vmem:[#allocation3 + $0x98] sm:$0xff]
        %v1059 = vld [vmem:[#allocation3 + $0xa0] sm:$0xff]
        %v1060 = vld [vmem:[#allocation3 + $0xa8] sm:$0xff]
        %v1061 = vld [vmem:[#allocation3 + $0xb0] sm:$0xff]
        %v1062 = vld [vmem:[#allocation3 + $0xb8] sm:$0xff]
        %v1063 = vld [vmem:[#allocation3 + $0xc0] sm:$0xff]
        %v1064 = vld [vmem:[#allocation3 + $0xc8] sm:$0xff]
        %v1065 = vld [vmem:[#allocation3 + $0xd0] sm:$0xff]
        %v1066 = vld [vmem:[#allocation3 + $0xd8] sm:$0xff]
        %v1067 = vld [vmem:[#allocation3 + $0xe0] sm:$0xff]
        %v1068 = vld [vmem:[#allocation3 + $0xe8] sm:$0xff]
        %v1069 = vld [vmem:[#allocation3 + $0xf0] sm:$0xff]
        %v1070 = vld [vmem:[#allocation3 + $0xf8] sm:$0xff]
        %vm1071 = vcmask 64512
        %v1073 = vsel %vm1071, %v1023, 0
        %v1076 = vsel %vm1071, %v1024, 0
        %v1079 = vsel %vm1071, %v1025, 0
        %v1082 = vsel %vm1071, %v1026, 0
        %v1085 = vsel %vm1071, %v1027, 0
        %v1088 = vsel %vm1071, %v1028, 0
        %v1091 = vsel %vm1071, %v1029, 0
        %v1094 = vsel %vm1071, %v1030, 0
        %v1097 = vsel %vm1071, %v1031, 0
        %v1100 = vsel %vm1071, %v1032, 0
        %v1103 = vsel %vm1071, %v1033, 0
        %v1106 = vsel %vm1071, %v1034, 0
        %v1109 = vsel %vm1071, %v1035, 0
        %v1112 = vsel %vm1071, %v1036, 0
        %v1115 = vsel %vm1071, %v1037, 0
        %v1118 = vsel %vm1071, %v1038, 0
        %v1121 = vsel %vm1071, %v1039, 0
        %v1124 = vsel %vm1071, %v1040, 0
        %v1127 = vsel %vm1071, %v1041, 0
        %v1130 = vsel %vm1071, %v1042, 0
        %v1133 = vsel %vm1071, %v1043, 0
        %v1136 = vsel %vm1071, %v1044, 0
        %v1139 = vsel %vm1071, %v1045, 0
        %v1142 = vsel %vm1071, %v1046, 0
        %v1145 = vsel %vm1071, %v1047, 0
        %v1148 = vsel %vm1071, %v1048, 0
        %v1151 = vsel %vm1071, %v1049, 0
        %v1154 = vsel %vm1071, %v1050, 0
        %v1157 = vsel %vm1071, %v1051, 0
        %v1160 = vsel %vm1071, %v1052, 0
        %v1163 = vsel %vm1071, %v1053, 0
        %v1166 = vsel %vm1071, %v1054, 0
        %v1169 = vsel %vm1071, %v1055, 0
        %v1172 = vsel %vm1071, %v1056, 0
        %v1175 = vsel %vm1071, %v1057, 0
        %v1178 = vsel %vm1071, %v1058, 0
        %v1181 = vsel %vm1071, %v1059, 0
        %v1184 = vsel %vm1071, %v1060, 0
        %v1187 = vsel %vm1071, %v1061, 0
        %v1190 = vsel %vm1071, %v1062, 0
        %v1193 = vsel %vm1071, %v1063, 0
        %v1196 = vsel %vm1071, %v1064, 0
        %v1199 = vsel %vm1071, %v1065, 0
        %v1202 = vsel %vm1071, %v1066, 0
        %v1205 = vsel %vm1071, %v1067, 0
        %v1208 = vsel %vm1071, %v1068, 0
        %v1211 = vsel %vm1071, %v1069, 0
        %v1214 = vsel %vm1071, %v1070, 0
        %1216 = vmatprep.subr.mxu0 0.0
        %1217 = vmatpush1.xpose.msra.mxu0 %v1121
        %1218 = vmatprep.subr.mxu0 0.0
        %1219 = vmatpush1.xpose.msra.mxu0 %v1124
        %1220 = vmatprep.subr.mxu0 0.0
        %1221 = vmatpush1.xpose.msra.mxu0 %v1127
        %1222 = vmatprep.subr.mxu0 0.0
        %1223 = vmatpush1.xpose.msra.mxu0 %v1130
        %1224 = vmatprep.subr.mxu0 0.0
        %1225 = vmatpush1.xpose.msra.mxu0 %v1133
        %1226 = vmatprep.subr.mxu0 0.0
        %1227 = vmatpush1.xpose.msra.mxu0 %v1136
        %1228 = vmatprep.subr.mxu0 0.0
        %1229 = vmatpush1.xpose.msra.mxu0 %v1139
        %1230 = vmatprep.subr.mxu0 0.0
        %1231 = vmatpush1.xpose.msra.mxu0 %v1142
        %1232 = vmatprep.subr.mxu0 0.0
        %1233 = vmatpush1.xpose.msra.mxu0 %v1145
        %1234 = vmatprep.subr.mxu0 0.0
        %1235 = vmatpush1.xpose.msra.mxu0 %v1148
        %1236 = vmatprep.subr.mxu0 0.0
        %1237 = vmatpush1.xpose.msra.mxu0 %v1151
        %1238 = vmatprep.subr.mxu0 0.0
        %1239 = vmatpush1.xpose.msra.mxu0 %v1154
        %1240 = vmatprep.subr.mxu0 0.0
        %1241 = vmatpush1.xpose.msra.mxu0 %v1157
        %1242 = vmatprep.subr.mxu0 0.0
        %1243 = vmatpush1.xpose.msra.mxu0 %v1160
        %1244 = vmatprep.subr.mxu0 0.0
        %1245 = vmatpush1.xpose.msra.mxu0 %v1163
        %1246 = vmatprep.subr.mxu0 0.0
        %1247 = vmatpush1.xpose.msra.mxu0 %v1166
        %1248 = vmatprep.subr.mxu0 0.0
        %1249 = vmatpush1.xpose.msra.mxu0 %v1169
        %1250 = vmatprep.subr.mxu0 0.0
        %1251 = vmatpush1.xpose.msra.mxu0 %v1172
        %1252 = vmatprep.subr.mxu0 0.0
        %1253 = vmatpush1.xpose.msra.mxu0 %v1175
        %1254 = vmatprep.subr.mxu0 0.0
        %1255 = vmatpush1.xpose.msra.mxu0 %v1178
        %1256 = vmatprep.subr.mxu0 0.0
        %1257 = vmatpush1.xpose.msra.mxu0 %v1181
        %1258 = vmatprep.subr.mxu0 0.0
        %1259 = vmatpush1.xpose.msra.mxu0 %v1184
        %1260 = vmatprep.subr.mxu0 0.0
        %1261 = vmatpush1.xpose.msra.mxu0 %v1187
        %1262 = vmatprep.subr.mxu0 0.0
        %1263 = vmatpush1.xpose.msra.mxu0 %v1190
        %1264 = vmatprep.subr.mxu0 0.0
        %1265 = vmatpush1.xpose.msra.mxu0 %v1193
        %1266 = vmatprep.subr.mxu0 0.0
        %1267 = vmatpush1.xpose.msra.mxu0 %v1196
        %1268 = vmatprep.subr.mxu0 0.0
        %1269 = vmatpush1.xpose.msra.mxu0 %v1199
        %1270 = vmatprep.subr.mxu0 0.0
        %1271 = vmatpush1.xpose.msra.mxu0 %v1202
        %1272 = vmatprep.subr.mxu0 0.0
        %1273 = vmatpush1.xpose.msra.mxu0 %v1205
        %1274 = vmatprep.subr.mxu0 0.0
        %1275 = vmatpush1.xpose.msra.mxu0 %v1208
        %1276 = vmatprep.subr.mxu0 0.0
        %1277 = vmatpush1.xpose.msra.mxu0 %v1211
        %1278 = vmatprep.subr.mxu0 0.0
        %1279 = vmatpush1.xpose.msra.mxu0 %v1214
        %1280 = vmatprep.mubr.f32.mxu0 0.0
        %1281 = vmatmul.mubr.f32.gmra.mrb[0].mxu0 %v1073
        %v1282 = vpop.f32.mrb[0].mxu0
        %v1283 = vadd.f32 0.0, %v1282
        %v1284 = vpop.f32.mrb[0].mxu0
        %v1285 = vadd.f32 0.0, %v1284
        %1286 = vmatprep.mubr.f32.mxu0 0.0
        %1287 = vmatmul.mubr.f32.gmra.mrb[0].mxu0 %v1076
        %v1288 = vpop.f32.mrb[0].mxu0
        %v1289 = vadd.f32 0.0, %v1288
        %v1290 = vpop.f32.mrb[0].mxu0
        %v1291 = vadd.f32 0.0, %v1290
        %1292 = vmatprep.mubr.f32.mxu0 0.0
        %1293 = vmatmul.mubr.f32.gmra.mrb[0].mxu0 %v1079
        %v1294 = vpop.f32.mrb[0].mxu0
        %v1295 = vadd.f32 0.0, %v1294
        %v1296 = vpop.f32.mrb[0].mxu0
        %v1297 = vadd.f32 0.0, %v1296
        %1298 = vmatprep.mubr.f32.mxu0 0.0
        %1299 = vmatmul.mubr.f32.gmra.mrb[0].mxu0 %v1082
        %v1300 = vpop.f32.mrb[0].mxu0
        %v1301 = vadd.f32 0.0, %v1300
        %v1302 = vpop.f32.mrb[0].mxu0
        %v1303 = vadd.f32 0.0, %v1302
        %1304 = vmatprep.mubr.f32.mxu0 0.0
        %1305 = vmatmul.mubr.f32.gmra.mrb[0].mxu0 %v1085
        %v1306 = vpop.f32.mrb[0].mxu0
        %v1307 = vadd.f32 0.0, %v1306
        %v1308 = vpop.f32.mrb[0].mxu0
        %v1309 = vadd.f32 0.0, %v1308
        %1310 = vmatprep.mubr.f32.mxu0 0.0
        %1311 = vmatmul.mubr.f32.gmra.mrb[0].mxu0 %v1088
        %v1312 = vpop.f32.mrb[0].mxu0
        %v1313 = vadd.f32 0.0, %v1312
        %v1314 = vpop.f32.mrb[0].mxu0
        %v1315 = vadd.f32 0.0, %v1314
        %1316 = vmatprep.mubr.f32.mxu0 0.0
        %1317 = vmatmul.mubr.f32.gmra.mrb[0].mxu0 %v1091
        %v1318 = vpop.f32.mrb[0].mxu0
        %v1319 = vadd.f32 0.0, %v1318
        %v1320 = vpop.f32.mrb[0].mxu0
        %v1321 = vadd.f32 0.0, %v1320
        %1322 = vmatprep.mubr.f32.mxu0 0.0
        %1323 = vmatmul.mubr.f32.gmra.mrb[0].mxu0 %v1094
        %v1324 = vpop.f32.mrb[0].mxu0
        %v1325 = vadd.f32 0.0, %v1324
        %v1326 = vpop.f32.mrb[0].mxu0
        %v1327 = vadd.f32 0.0, %v1326
        %1328 = vmatprep.mubr.f32.mxu0 0.0
        %1329 = vmatmul.mubr.f32.gmra.mrb[0].mxu0 %v1097
        %v1330 = vpop.f32.mrb[0].mxu0
        %v1331 = vadd.f32 0.0, %v1330
        %v1332 = vpop.f32.mrb[0].mxu0
        %v1333 = vadd.f32 0.0, %v1332
        %1334 = vmatprep.mubr.f32.mxu0 0.0
        %1335 = vmatmul.mubr.f32.gmra.mrb[0].mxu0 %v1100
        %v1336 = vpop.f32.mrb[0].mxu0
        %v1337 = vadd.f32 0.0, %v1336
        %v1338 = vpop.f32.mrb[0].mxu0
        %v1339 = vadd.f32 0.0, %v1338
        %1340 = vmatprep.mubr.f32.mxu0 0.0
        %1341 = vmatmul.mubr.f32.gmra.mrb[0].mxu0 %v1103
        %v1342 = vpop.f32.mrb[0].mxu0
        %v1343 = vadd.f32 0.0, %v1342
        %v1344 = vpop.f32.mrb[0].mxu0
        %v1345 = vadd.f32 0.0, %v1344
        %1346 = vmatprep.mubr.f32.mxu0 0.0
        %1347 = vmatmul.mubr.f32.gmra.mrb[0].mxu0 %v1106
        %v1348 = vpop.f32.mrb[0].mxu0
        %v1349 = vadd.f32 0.0, %v1348
        %v1350 = vpop.f32.mrb[0].mxu0
        %v1351 = vadd.f32 0.0, %v1350
        %1352 = vmatprep.mubr.f32.mxu0 0.0
        %1353 = vmatmul.mubr.f32.gmra.mrb[0].mxu0 %v1109
        %v1354 = vpop.f32.mrb[0].mxu0
        %v1355 = vadd.f32 0.0, %v1354
        %v1356 = vpop.f32.mrb[0].mxu0
        %v1357 = vadd.f32 0.0, %v1356
        %1358 = vmatprep.mubr.f32.mxu0 0.0
        %1359 = vmatmul.mubr.f32.gmra.mrb[0].mxu0 %v1112
        %v1360 = vpop.f32.mrb[0].mxu0
        %v1361 = vadd.f32 0.0, %v1360
        %v1362 = vpop.f32.mrb[0].mxu0
        %v1363 = vadd.f32 0.0, %v1362
        %1364 = vmatprep.mubr.f32.mxu0 0.0
        %1365 = vmatmul.mubr.f32.gmra.mrb[0].mxu0 %v1115
        %v1366 = vpop.f32.mrb[0].mxu0
        %v1367 = vadd.f32 0.0, %v1366
        %v1368 = vpop.f32.mrb[0].mxu0
        %v1369 = vadd.f32 0.0, %v1368
        %1370 = vmatprep.mubr.f32.mxu0 0.0
        %1371 = vmatmul.mubr.f32.gmra.mrb[0].mxu0 %v1118
        %v1372 = vpop.f32.mrb[0].mxu0
        %v1373 = vadd.f32 0.0, %v1372
        %v1374 = vpop.f32.mrb[0].mxu0
        %v1375 = vadd.f32 0.0, %v1374
        %1376 = vdwg.mxu0
        %v1377 = vmax.f32 %v1283, %v1285
        %1378 = vmax.xlane.f32.xlu0 %v1377
        %v1379 = vpop.xlane.xlu0 %1378
        %v1380 = vmax.f32 %v1289, %v1291
        %1381 = vmax.xlane.f32.xlu0 %v1380
        %v1382 = vpop.xlane.xlu0 %1381
        %v1383 = vmax.f32 %v1295, %v1297
        %1384 = vmax.xlane.f32.xlu0 %v1383
        %v1385 = vpop.xlane.xlu0 %1384
        %v1386 = vmax.f32 %v1301, %v1303
        %1387 = vmax.xlane.f32.xlu0 %v1386
        %v1388 = vpop.xlane.xlu0 %1387
        %v1389 = vmax.f32 %v1307, %v1309
        %1390 = vmax.xlane.f32.xlu0 %v1389
        %v1391 = vpop.xlane.xlu0 %1390
        %v1392 = vmax.f32 %v1313, %v1315
        %1393 = vmax.xlane.f32.xlu0 %v1392
        %v1394 = vpop.xlane.xlu0 %1393
        %v1395 = vmax.f32 %v1319, %v1321
        %1396 = vmax.xlane.f32.xlu0 %v1395
        %v1397 = vpop.xlane.xlu0 %1396
        %v1398 = vmax.f32 %v1325, %v1327
        %1399 = vmax.xlane.f32.xlu0 %v1398
        %v1400 = vpop.xlane.xlu0 %1399
        %v1401 = vmax.f32 %v1331, %v1333
        %1402 = vmax.xlane.f32.xlu0 %v1401
        %v1403 = vpop.xlane.xlu0 %1402
        %v1404 = vmax.f32 %v1337, %v1339
        %1405 = vmax.xlane.f32.xlu0 %v1404
        %v1406 = vpop.xlane.xlu0 %1405
        %v1407 = vmax.f32 %v1343, %v1345
        %1408 = vmax.xlane.f32.xlu0 %v1407
        %v1409 = vpop.xlane.xlu0 %1408
        %v1410 = vmax.f32 %v1349, %v1351
        %1411 = vmax.xlane.f32.xlu0 %v1410
        %v1412 = vpop.xlane.xlu0 %1411
        %v1413 = vmax.f32 %v1355, %v1357
        %1414 = vmax.xlane.f32.xlu0 %v1413
        %v1415 = vpop.xlane.xlu0 %1414
        %v1416 = vmax.f32 %v1361, %v1363
        %1417 = vmax.xlane.f32.xlu0 %v1416
        %v1418 = vpop.xlane.xlu0 %1417
        %v1419 = vmax.f32 %v1367, %v1369
        %1420 = vmax.xlane.f32.xlu0 %v1419
        %v1421 = vpop.xlane.xlu0 %1420
        %v1422 = vmax.f32 %v1373, %v1375
        %1423 = vmax.xlane.f32.xlu0 %v1422
        %v1424 = vpop.xlane.xlu0 %1423
        %v1425 = vsub.f32 %v1283, %v1379
        %v1426 = vsub.f32 %v1285, %v1379
        %v1427 = vsub.f32 %v1289, %v1382
        %v1428 = vsub.f32 %v1291, %v1382
        %v1429 = vsub.f32 %v1295, %v1385
        %v1430 = vsub.f32 %v1297, %v1385
        %v1431 = vsub.f32 %v1301, %v1388
        %v1432 = vsub.f32 %v1303, %v1388
        %v1433 = vsub.f32 %v1307, %v1391
        %v1434 = vsub.f32 %v1309, %v1391
        %v1435 = vsub.f32 %v1313, %v1394
        %v1436 = vsub.f32 %v1315, %v1394
        %v1437 = vsub.f32 %v1319, %v1397
        %v1438 = vsub.f32 %v1321, %v1397
        %v1439 = vsub.f32 %v1325, %v1400
        %v1440 = vsub.f32 %v1327, %v1400
        %v1441 = vsub.f32 %v1331, %v1403
        %v1442 = vsub.f32 %v1333, %v1403
        %v1443 = vsub.f32 %v1337, %v1406
        %v1444 = vsub.f32 %v1339, %v1406
        %v1445 = vsub.f32 %v1343, %v1409
        %v1446 = vsub.f32 %v1345, %v1409
        %v1447 = vsub.f32 %v1349, %v1412
        %v1448 = vsub.f32 %v1351, %v1412
        %v1449 = vsub.f32 %v1355, %v1415
        %v1450 = vsub.f32 %v1357, %v1415
        %v1451 = vsub.f32 %v1361, %v1418
        %v1452 = vsub.f32 %v1363, %v1418
        %v1453 = vsub.f32 %v1367, %v1421
        %v1454 = vsub.f32 %v1369, %v1421
        %v1455 = vsub.f32 %v1373, %v1424
        %v1456 = vsub.f32 %v1375, %v1424
        %v1457 = vmul.f32 %v1425, 1.442695
        %v1458 = vpow.pop %v1457
        %v1459 = vmul.f32 %v1426, 1.442695
        %v1460 = vpow.pop %v1459
        %v1461 = vmul.f32 %v1427, 1.442695
        %v1462 = vpow.pop %v1461
        %v1463 = vmul.f32 %v1428, 1.442695
        %v1464 = vpow.pop %v1463
        %v1465 = vmul.f32 %v1429, 1.442695
        %v1466 = vpow.pop %v1465
        %v1467 = vmul.f32 %v1430, 1.442695
        %v1468 = vpow.pop %v1467
        %v1469 = vmul.f32 %v1431, 1.442695
        %v1470 = vpow.pop %v1469
        %v1471 = vmul.f32 %v1432, 1.442695
        %v1472 = vpow.pop %v1471
        %v1473 = vmul.f32 %v1433, 1.442695
        %v1474 = vpow.pop %v1473
        %v1475 = vmul.f32 %v1434, 1.442695
        %v1476 = vpow.pop %v1475
        %v1477 = vmul.f32 %v1435, 1.442695
        %v1478 = vpow.pop %v1477
        %v1479 = vmul.f32 %v1436, 1.442695
        %v1480 = vpow.pop %v1479
        %v1481 = vmul.f32 %v1437, 1.442695
        %v1482 = vpow.pop %v1481
        %v1483 = vmul.f32 %v1438, 1.442695
        %v1484 = vpow.pop %v1483
        %v1485 = vmul.f32 %v1439, 1.442695
        %v1486 = vpow.pop %v1485
        %v1487 = vmul.f32 %v1440, 1.442695
        %v1488 = vpow.pop %v1487
        %v1489 = vmul.f32 %v1441, 1.442695
        %v1490 = vpow.pop %v1489
        %v1491 = vmul.f32 %v1442, 1.442695
        %v1492 = vpow.pop %v1491
        %v1493 = vmul.f32 %v1443, 1.442695
        %v1494 = vpow.pop %v1493
        %v1495 = vmul.f32 %v1444, 1.442695
        %v1496 = vpow.pop %v1495
        %v1497 = vmul.f32 %v1445, 1.442695
        %v1498 = vpow.pop %v1497
        %v1499 = vmul.f32 %v1446, 1.442695
        %v1500 = vpow.pop %v1499
        %v1501 = vmul.f32 %v1447, 1.442695
        %v1502 = vpow.pop %v1501
        %v1503 = vmul.f32 %v1448, 1.442695
        %v1504 = vpow.pop %v1503
        %v1505 = vmul.f32 %v1449, 1.442695
        %v1506 = vpow.pop %v1505
        %v1507 = vmul.f32 %v1450, 1.442695
        %v1508 = vpow.pop %v1507
        %v1509 = vmul.f32 %v1451, 1.442695
        %v1510 = vpow.pop %v1509
        %v1511 = vmul.f32 %v1452, 1.442695
        %v1512 = vpow.pop %v1511
        %v1513 = vmul.f32 %v1453, 1.442695
        %v1514 = vpow.pop %v1513
        %v1515 = vmul.f32 %v1454, 1.442695
        %v1516 = vpow.pop %v1515
        %v1517 = vmul.f32 %v1455, 1.442695
        %v1518 = vpow.pop %v1517
        %v1519 = vmul.f32 %v1456, 1.442695
        %v1520 = vpow.pop %v1519
        %v1521 = vadd.f32 %v1458, %v1460
        %1522 = vadd.xlane.f32.xlu0 %v1521
        %v1523 = vpop.xlane.xlu0 %1522
        %v1524 = vadd.f32 %v1462, %v1464
        %1525 = vadd.xlane.f32.xlu0 %v1524
        %v1526 = vpop.xlane.xlu0 %1525
        %v1527 = vadd.f32 %v1466, %v1468
        %1528 = vadd.xlane.f32.xlu0 %v1527
        %v1529 = vpop.xlane.xlu0 %1528
        %v1530 = vadd.f32 %v1470, %v1472
        %1531 = vadd.xlane.f32.xlu0 %v1530
        %v1532 = vpop.xlane.xlu0 %1531
        %v1533 = vadd.f32 %v1474, %v1476
        %1534 = vadd.xlane.f32.xlu0 %v1533
        %v1535 = vpop.xlane.xlu0 %1534
        %v1536 = vadd.f32 %v1478, %v1480
        %1537 = vadd.xlane.f32.xlu0 %v1536
        %v1538 = vpop.xlane.xlu0 %1537
        %v1539 = vadd.f32 %v1482, %v1484
        %1540 = vadd.xlane.f32.xlu0 %v1539
        %v1541 = vpop.xlane.xlu0 %1540
        %v1542 = vadd.f32 %v1486, %v1488
        %1543 = vadd.xlane.f32.xlu0 %v1542
        %v1544 = vpop.xlane.xlu0 %1543
        %v1545 = vadd.f32 %v1490, %v1492
        %1546 = vadd.xlane.f32.xlu0 %v1545
        %v1547 = vpop.xlane.xlu0 %1546
        %v1548 = vadd.f32 %v1494, %v1496
        %1549 = vadd.xlane.f32.xlu0 %v1548
        %v1550 = vpop.xlane.xlu0 %1549
        %v1551 = vadd.f32 %v1498, %v1500
        %1552 = vadd.xlane.f32.xlu0 %v1551
        %v1553 = vpop.xlane.xlu0 %1552
        %v1554 = vadd.f32 %v1502, %v1504
        %1555 = vadd.xlane.f32.xlu0 %v1554
        %v1556 = vpop.xlane.xlu0 %1555
        %v1557 = vadd.f32 %v1506, %v1508
        %1558 = vadd.xlane.f32.xlu0 %v1557
        %v1559 = vpop.xlane.xlu0 %1558
        %v1560 = vadd.f32 %v1510, %v1512
        %1561 = vadd.xlane.f32.xlu0 %v1560
        %v1562 = vpop.xlane.xlu0 %1561
        %v1563 = vadd.f32 %v1514, %v1516
        %1564 = vadd.xlane.f32.xlu0 %v1563
        %v1565 = vpop.xlane.xlu0 %1564
        %v1566 = vadd.f32 %v1518, %v1520
        %1567 = vadd.xlane.f32.xlu0 %v1566
        %v1568 = vpop.xlane.xlu0 %1567
        %v1569 = vld [vmem:[#allocation4] sm:$0xff]
        %v1570 = vld [vmem:[#allocation4 + $0x8] sm:$0xff]
        %v1571 = vld [vmem:[#allocation4 + $0x10] sm:$0xff]
        %v1572 = vld [vmem:[#allocation4 + $0x18] sm:$0xff]
        %v1573 = vld [vmem:[#allocation4 + $0x20] sm:$0xff]
        %v1574 = vld [vmem:[#allocation4 + $0x28] sm:$0xff]
        %v1575 = vld [vmem:[#allocation4 + $0x30] sm:$0xff]
        %v1576 = vld [vmem:[#allocation4 + $0x38] sm:$0xff]
        %v1577 = vld [vmem:[#allocation4 + $0x40] sm:$0xff]
        %v1578 = vld [vmem:[#allocation4 + $0x48] sm:$0xff]
        %v1579 = vld [vmem:[#allocation4 + $0x50] sm:$0xff]
        %v1580 = vld [vmem:[#allocation4 + $0x58] sm:$0xff]
        %v1581 = vld [vmem:[#allocation4 + $0x60] sm:$0xff]
        %v1582 = vld [vmem:[#allocation4 + $0x68] sm:$0xff]
        %v1583 = vld [vmem:[#allocation4 + $0x70] sm:$0xff]
        %v1584 = vld [vmem:[#allocation4 + $0x78] sm:$0xff]
        %v1585 = vld [vmem:[#allocation4 + $0x80] sm:$0xff]
        %v1586 = vld [vmem:[#allocation4 + $0x88] sm:$0xff]
        %v1587 = vld [vmem:[#allocation4 + $0x90] sm:$0xff]
        %v1588 = vld [vmem:[#allocation4 + $0x98] sm:$0xff]
        %v1589 = vld [vmem:[#allocation4 + $0xa0] sm:$0xff]
        %v1590 = vld [vmem:[#allocation4 + $0xa8] sm:$0xff]
        %v1591 = vld [vmem:[#allocation4 + $0xb0] sm:$0xff]
        %v1592 = vld [vmem:[#allocation4 + $0xb8] sm:$0xff]
        %v1593 = vld [vmem:[#allocation4 + $0xc0] sm:$0xff]
        %v1594 = vld [vmem:[#allocation4 + $0xc8] sm:$0xff]
        %v1595 = vld [vmem:[#allocation4 + $0xd0] sm:$0xff]
        %v1596 = vld [vmem:[#allocation4 + $0xd8] sm:$0xff]
        %v1597 = vld [vmem:[#allocation4 + $0xe0] sm:$0xff]
        %v1598 = vld [vmem:[#allocation4 + $0xe8] sm:$0xff]
        %v1599 = vld [vmem:[#allocation4 + $0xf0] sm:$0xff]
        %v1600 = vld [vmem:[#allocation4 + $0xf8] sm:$0xff]
        %1601 = vmatprep.subr.mxu0 0.0
        %1602 = vmatpush1.msra.mxu0 %v1569
        %1603 = vmatprep.subr.mxu0 0.0
        %1604 = vmatpush1.msra.mxu0 %v1570
        %1605 = vmatprep.subr.mxu0 0.0
        %1606 = vmatpush1.msra.mxu0 %v1571
        %1607 = vmatprep.subr.mxu0 0.0
        %1608 = vmatpush1.msra.mxu0 %v1572
        %1609 = vmatprep.subr.mxu0 0.0
        %1610 = vmatpush1.msra.mxu0 %v1573
        %1611 = vmatprep.subr.mxu0 0.0
        %1612 = vmatpush1.msra.mxu0 %v1574
        %1613 = vmatprep.subr.mxu0 0.0
        %1614 = vmatpush1.msra.mxu0 %v1575
        %1615 = vmatprep.subr.mxu0 0.0
        %1616 = vmatpush1.msra.mxu0 %v1576
        %1617 = vmatprep.subr.mxu0 0.0
        %1618 = vmatpush1.msra.mxu0 %v1577
        %1619 = vmatprep.subr.mxu0 0.0
        %1620 = vmatpush1.msra.mxu0 %v1578
        %1621 = vmatprep.subr.mxu0 0.0
        %1622 = vmatpush1.msra.mxu0 %v1579
        %1623 = vmatprep.subr.mxu0 0.0
        %1624 = vmatpush1.msra.mxu0 %v1580
        %1625 = vmatprep.subr.mxu0 0.0
        %1626 = vmatpush1.msra.mxu0 %v1581
        %1627 = vmatprep.subr.mxu0 0.0
        %1628 = vmatpush1.msra.mxu0 %v1582
        %1629 = vmatprep.subr.mxu0 0.0
        %1630 = vmatpush1.msra.mxu0 %v1583
        %1631 = vmatprep.subr.mxu0 0.0
        %1632 = vmatpush1.msra.mxu0 %v1584
        %1633 = vmatprep.subr.mxu0 0.0
        %1634 = vmatpush1.msra.mxu0 %v1585
        %1635 = vmatprep.subr.mxu0 0.0
        %1636 = vmatpush1.msra.mxu0 %v1586
        %1637 = vmatprep.subr.mxu0 0.0
        %1638 = vmatpush1.msra.mxu0 %v1587
        %1639 = vmatprep.subr.mxu0 0.0
        %1640 = vmatpush1.msra.mxu0 %v1588
        %1641 = vmatprep.subr.mxu0 0.0
        %1642 = vmatpush1.msra.mxu0 %v1589
        %1643 = vmatprep.subr.mxu0 0.0
        %1644 = vmatpush1.msra.mxu0 %v1590
        %1645 = vmatprep.subr.mxu0 0.0
        %1646 = vmatpush1.msra.mxu0 %v1591
        %1647 = vmatprep.subr.mxu0 0.0
        %1648 = vmatpush1.msra.mxu0 %v1592
        %1649 = vmatprep.subr.mxu0 0.0
        %1650 = vmatpush1.msra.mxu0 %v1593
        %1651 = vmatprep.subr.mxu0 0.0
        %1652 = vmatpush1.msra.mxu0 %v1594
        %1653 = vmatprep.subr.mxu0 0.0
        %1654 = vmatpush1.msra.mxu0 %v1595
        %1655 = vmatprep.subr.mxu0 0.0
        %1656 = vmatpush1.msra.mxu0 %v1596
        %1657 = vmatprep.subr.mxu0 0.0
        %1658 = vmatpush1.msra.mxu0 %v1597
        %1659 = vmatprep.subr.mxu0 0.0
        %1660 = vmatpush1.msra.mxu0 %v1598
        %1661 = vmatprep.subr.mxu0 0.0
        %1662 = vmatpush1.msra.mxu0 %v1599
        %1663 = vmatprep.subr.mxu0 0.0
        %1664 = vmatpush1.msra.mxu0 %v1600
        %1665 = vmatprep.mubr.f32.mxu0 %v1460
        %1666 = vmatmul.mubr.f32.gmra.mrb[0].mxu0 %v1458
        %v1667 = vpop.f32.mrb[0].mxu0
        %v1668 = vadd.f32 0.0, %v1667
        %v1669 = vpop.f32.mrb[0].mxu0
        %1670 = vmatprep.mubr.f32.mxu0 %v1464
        %1671 = vmatmul.mubr.f32.gmra.mrb[0].mxu0 %v1462
        %v1672 = vpop.f32.mrb[0].mxu0
        %v1673 = vadd.f32 0.0, %v1672
        %v1674 = vpop.f32.mrb[0].mxu0
        %1675 = vmatprep.mubr.f32.mxu0 %v1468
        %1676 = vmatmul.mubr.f32.gmra.mrb[0].mxu0 %v1466
        %v1677 = vpop.f32.mrb[0].mxu0
        %v1678 = vadd.f32 0.0, %v1677
        %v1679 = vpop.f32.mrb[0].mxu0
        %1680 = vmatprep.mubr.f32.mxu0 %v1472
        %1681 = vmatmul.mubr.f32.gmra.mrb[0].mxu0 %v1470
        %v1682 = vpop.f32.mrb[0].mxu0
        %v1683 = vadd.f32 0.0, %v1682
        %v1684 = vpop.f32.mrb[0].mxu0
        %1685 = vmatprep.mubr.f32.mxu0 %v1476
        %1686 = vmatmul.mubr.f32.gmra.mrb[0].mxu0 %v1474
        %v1687 = vpop.f32.mrb[0].mxu0
        %v1688 = vadd.f32 0.0, %v1687
        %v1689 = vpop.f32.mrb[0].mxu0
        %1690 = vmatprep.mubr.f32.mxu0 %v1480
        %1691 = vmatmul.mubr.f32.gmra.mrb[0].mxu0 %v1478
        %v1692 = vpop.f32.mrb[0].mxu0
        %v1693 = vadd.f32 0.0, %v1692
        %v1694 = vpop.f32.mrb[0].mxu0
        %1695 = vmatprep.mubr.f32.mxu0 %v1484
        %1696 = vmatmul.mubr.f32.gmra.mrb[0].mxu0 %v1482
        %v1697 = vpop.f32.mrb[0].mxu0
        %v1698 = vadd.f32 0.0, %v1697
        %v1699 = vpop.f32.mrb[0].mxu0
        %1700 = vmatprep.mubr.f32.mxu0 %v1488
        %1701 = vmatmul.mubr.f32.gmra.mrb[0].mxu0 %v1486
        %v1702 = vpop.f32.mrb[0].mxu0
        %v1703 = vadd.f32 0.0, %v1702
        %v1704 = vpop.f32.mrb[0].mxu0
        %1705 = vmatprep.mubr.f32.mxu0 %v1492
        %1706 = vmatmul.mubr.f32.gmra.mrb[0].mxu0 %v1490
        %v1707 = vpop.f32.mrb[0].mxu0
        %v1708 = vadd.f32 0.0, %v1707
        %v1709 = vpop.f32.mrb[0].mxu0
        %1710 = vmatprep.mubr.f32.mxu0 %v1496
        %1711 = vmatmul.mubr.f32.gmra.mrb[0].mxu0 %v1494
        %v1712 = vpop.f32.mrb[0].mxu0
        %v1713 = vadd.f32 0.0, %v1712
        %v1714 = vpop.f32.mrb[0].mxu0
        %1715 = vmatprep.mubr.f32.mxu0 %v1500
        %1716 = vmatmul.mubr.f32.gmra.mrb[0].mxu0 %v1498
        %v1717 = vpop.f32.mrb[0].mxu0
        %v1718 = vadd.f32 0.0, %v1717
        %v1719 = vpop.f32.mrb[0].mxu0
        %1720 = vmatprep.mubr.f32.mxu0 %v1504
        %1721 = vmatmul.mubr.f32.gmra.mrb[0].mxu0 %v1502
        %v1722 = vpop.f32.mrb[0].mxu0
        %v1723 = vadd.f32 0.0, %v1722
        %v1724 = vpop.f32.mrb[0].mxu0
        %1725 = vmatprep.mubr.f32.mxu0 %v1508
        %1726 = vmatmul.mubr.f32.gmra.mrb[0].mxu0 %v1506
        %v1727 = vpop.f32.mrb[0].mxu0
        %v1728 = vadd.f32 0.0, %v1727
        %v1729 = vpop.f32.mrb[0].mxu0
        %1730 = vmatprep.mubr.f32.mxu0 %v1512
        %1731 = vmatmul.mubr.f32.gmra.mrb[0].mxu0 %v1510
        %v1732 = vpop.f32.mrb[0].mxu0
        %v1733 = vadd.f32 0.0, %v1732
        %v1734 = vpop.f32.mrb[0].mxu0
        %1735 = vmatprep.mubr.f32.mxu0 %v1516
        %1736 = vmatmul.mubr.f32.gmra.mrb[0].mxu0 %v1514
        %v1737 = vpop.f32.mrb[0].mxu0
        %v1738 = vadd.f32 0.0, %v1737
        %v1739 = vpop.f32.mrb[0].mxu0
        %1740 = vmatprep.mubr.f32.mxu0 %v1520
        %1741 = vmatmul.mubr.f32.gmra.mrb[0].mxu0 %v1518
        %v1742 = vpop.f32.mrb[0].mxu0
        %v1743 = vadd.f32 0.0, %v1742
        %v1744 = vpop.f32.mrb[0].mxu0
        %1745 = vdwg.mxu0
        %v1746 = vrcp.pop %v1523
        %v1747 = vrcp.pop %v1526
        %v1748 = vrcp.pop %v1529
        %v1749 = vrcp.pop %v1532
        %v1750 = vrcp.pop %v1535
        %v1751 = vrcp.pop %v1538
        %v1752 = vrcp.pop %v1541
        %v1753 = vrcp.pop %v1544
        %v1754 = vrcp.pop %v1547
        %v1755 = vrcp.pop %v1550
        %v1756 = vrcp.pop %v1553
        %v1757 = vrcp.pop %v1556
        %v1758 = vrcp.pop %v1559
        %v1759 = vrcp.pop %v1562
        %v1760 = vrcp.pop %v1565
        %v1761 = vrcp.pop %v1568
        %v1762 = vmul.f32 %v1668, %v1746
        %v1763 = vmul.f32 %v1673, %v1747
        %v1764 = vmul.f32 %v1678, %v1748
        %v1765 = vmul.f32 %v1683, %v1749
        %v1766 = vmul.f32 %v1688, %v1750
        %v1767 = vmul.f32 %v1693, %v1751
        %v1768 = vmul.f32 %v1698, %v1752
        %v1769 = vmul.f32 %v1703, %v1753
        %v1770 = vmul.f32 %v1708, %v1754
        %v1771 = vmul.f32 %v1713, %v1755
        %v1772 = vmul.f32 %v1718, %v1756
        %v1773 = vmul.f32 %v1723, %v1757
        %v1774 = vmul.f32 %v1728, %v1758
        %v1775 = vmul.f32 %v1733, %v1759
        %v1776 = vmul.f32 %v1738, %v1760
        %v1777 = vmul.f32 %v1743, %v1761
        %1778 = vst.msk [vmem:[%s286] sm:$0xff] %vm1071, %v1762
        %1779 = vst.msk [vmem:[%s286 + $0x8] sm:$0xff] %vm1071, %v1763
        %1780 = vst.msk [vmem:[%s286 + $0x10] sm:$0xff] %vm1071, %v1764
        %1781 = vst.msk [vmem:[%s286 + $0x18] sm:$0xff] %vm1071, %v1765
        %1782 = vst.msk [vmem:[%s286 + $0x20] sm:$0xff] %vm1071, %v1766
        %1783 = vst.msk [vmem:[%s286 + $0x28] sm:$0xff] %vm1071, %v1767
        %1784 = vst.msk [vmem:[%s286 + $0x30] sm:$0xff] %vm1071, %v1768
        %1785 = vst.msk [vmem:[%s286 + $0x38] sm:$0xff] %vm1071, %v1769
        %1786 = vst.msk [vmem:[%s286 + $0x40] sm:$0xff] %vm1071, %v1770
        %1787 = vst.msk [vmem:[%s286 + $0x48] sm:$0xff] %vm1071, %v1771
        %1788 = vst.msk [vmem:[%s286 + $0x50] sm:$0xff] %vm1071, %v1772
        %1789 = vst.msk [vmem:[%s286 + $0x58] sm:$0xff] %vm1071, %v1773
        %1790 = vst.msk [vmem:[%s286 + $0x60] sm:$0xff] %vm1071, %v1774
        %1791 = vst.msk [vmem:[%s286 + $0x68] sm:$0xff] %vm1071, %v1775
        %1792 = vst.msk [vmem:[%s286 + $0x70] sm:$0xff] %vm1071, %v1776
        %1793 = vst.msk [vmem:[%s286 + $0x78] sm:$0xff] %vm1071, %v1777
        %v1794 = vld [vmem:[%s271] sm:$0xff]
        %1795 = vxpose.xlu0.b32.start [1/16] %v1762, 128
        %1796 = vxpose.xlu0.b32.cont [2/16] %v1763, 128
        %1797 = vxpose.xlu0.b32.cont [3/16] %v1764, 128
        %1798 = vxpose.xlu0.b32.cont [4/16] %v1765, 128
        %1799 = vxpose.xlu0.b32.cont [5/16] %v1766, 128
        %1800 = vxpose.xlu0.b32.cont [6/16] %v1767, 128
        %1801 = vxpose.xlu0.b32.cont [7/16] %v1768, 128
        %1802 = vxpose.xlu0.b32.cont [8/16] %v1769, 128
        %1803 = vxpose.xlu0.b32.cont [9/16] %v1770, 128
        %1804 = vxpose.xlu0.b32.cont [10/16] %v1771, 128
        %1805 = vxpose.xlu0.b32.cont [11/16] %v1772, 128
        %1806 = vxpose.xlu0.b32.cont [12/16] %v1773, 128
        %1807 = vxpose.xlu0.b32.cont [13/16] %v1774, 128
        %1808 = vxpose.xlu0.b32.cont [14/16] %v1775, 128
        %1809 = vxpose.xlu0.b32.cont [15/16] %v1776, 128
        %1810 = vxpose.xlu0.b32.end [16/16] %v1777, 128
        %v1811 = vpop.trf.xlu0
        %v1812 = vpop.trf.xlu0
        %v1813 = vpop.trf.xlu0
        %v1814 = vpop.trf.xlu0
        %v1815 = vpop.trf.xlu0
        %v1816 = vpop.trf.xlu0
        %v1817 = vpop.trf.xlu0
        %v1818 = vpop.trf.xlu0
        %v1819 = vpop.trf.xlu0
        %v1820 = vpop.trf.xlu0
        %v1821 = vpop.trf.xlu0
        %v1822 = vpop.trf.xlu0
        %v1823 = vpop.trf.xlu0
        %v1824 = vpop.trf.xlu0
        %v1825 = vpop.trf.xlu0
        %v1826 = vpop.trf.xlu0
        %1827 = vmatprep.subr.mxu0 0.0
        %1828 = vmatpush1.msra.mxu0 %v1762
        %1829 = vmatprep.subr.mxu0 0.0
        %1830 = vmatpush1.msra.mxu0 %v1763
        %1831 = vmatprep.subr.mxu0 0.0
        %1832 = vmatpush1.msra.mxu0 %v1764
        %1833 = vmatprep.subr.mxu0 0.0
        %1834 = vmatpush1.msra.mxu0 %v1765
        %1835 = vmatprep.subr.mxu0 0.0
        %1836 = vmatpush1.msra.mxu0 %v1766
        %1837 = vmatprep.subr.mxu0 0.0
        %1838 = vmatpush1.msra.mxu0 %v1767
        %1839 = vmatprep.subr.mxu0 0.0
        %1840 = vmatpush1.msra.mxu0 %v1768
        %1841 = vmatprep.subr.mxu0 0.0
        %1842 = vmatpush1.msra.mxu0 %v1769
        %1843 = vmatprep.subr.mxu0 0.0
        %1844 = vmatpush1.msra.mxu0 %v1770
        %1845 = vmatprep.subr.mxu0 0.0
        %1846 = vmatpush1.msra.mxu0 %v1771
        %1847 = vmatprep.subr.mxu0 0.0
        %1848 = vmatpush1.msra.mxu0 %v1772
        %1849 = vmatprep.subr.mxu0 0.0
        %1850 = vmatpush1.msra.mxu0 %v1773
        %1851 = vmatprep.subr.mxu0 0.0
        %1852 = vmatpush1.msra.mxu0 %v1774
        %1853 = vmatprep.subr.mxu0 0.0
        %1854 = vmatpush1.msra.mxu0 %v1775
        %1855 = vmatprep.subr.mxu0 0.0
        %1856 = vmatpush1.msra.mxu0 %v1776
        %1857 = vmatprep.subr.mxu0 0.0
        %1858 = vmatpush1.msra.mxu0 %v1777
        %1859 = vmatprep.subr.mxu0 0.0
        %1860 = vmatpush1.msra.mxu0 0.0
        %1861 = vmatprep.subr.mxu0 0.0
        %1862 = vmatpush1.msra.mxu0 0.0
        %1863 = vmatprep.subr.mxu0 0.0
        %1864 = vmatpush1.msra.mxu0 0.0
        %1865 = vmatprep.subr.mxu0 0.0
        %1866 = vmatpush1.msra.mxu0 0.0
        %1867 = vmatprep.subr.mxu0 0.0
        %1868 = vmatpush1.msra.mxu0 0.0
        %1869 = vmatprep.subr.mxu0 0.0
        %1870 = vmatpush1.msra.mxu0 0.0
        %1871 = vmatprep.subr.mxu0 0.0
        %1872 = vmatpush1.msra.mxu0 0.0
        %1873 = vmatprep.subr.mxu0 0.0
        %1874 = vmatpush1.msra.mxu0 0.0
        %1875 = vmatprep.subr.mxu0 0.0
        %1876 = vmatpush1.msra.mxu0 0.0
        %1877 = vmatprep.subr.mxu0 0.0
        %1878 = vmatpush1.msra.mxu0 0.0
        %1879 = vmatprep.subr.mxu0 0.0
        %1880 = vmatpush1.msra.mxu0 0.0
        %1881 = vmatprep.subr.mxu0 0.0
        %1882 = vmatpush1.msra.mxu0 0.0
        %1883 = vmatprep.subr.mxu0 0.0
        %1884 = vmatpush1.msra.mxu0 0.0
        %1885 = vmatprep.subr.mxu0 0.0
        %1886 = vmatpush1.msra.mxu0 0.0
        %1887 = vmatprep.subr.mxu0 0.0
        %1888 = vmatpush1.msra.mxu0 0.0
        %1889 = vmatprep.subr.mxu0 0.0
        %1890 = vmatpush1.msra.mxu0 0.0
        %1891 = vmatprep.mubr.f32.mxu0 0.0
        %1892 = vmatmul.mubr.f32.gmra.mrb[0].mxu0 %v1811
        %v1893 = vpop.f32.mrb[0].mxu0
        %v1894 = vadd.f32 0.0, %v1893
        %v1895 = vpop.f32.mrb[0].mxu0
        %1896 = vdwg.mxu0
        %v1897 = vadd.f32 %v1794, %v1894
        %1898 = vst.msk [vmem:[%s271] sm:$0xff] %vm1071, %v1897
        %v1899 = vld [vmem:[%s277] sm:$0x1]
        %v1900 = vsel %vm1071, %v1762, 0.0
        %v1901 = vsel %vm1071, %v1763, 0.0
        %v1902 = vadd.f32 %v1900, %v1901
        %v1903 = vsel %vm1071, %v1764, 0.0
        %v1904 = vadd.f32 %v1902, %v1903
        %v1905 = vsel %vm1071, %v1765, 0.0
        %v1906 = vadd.f32 %v1904, %v1905
        %v1907 = vsel %vm1071, %v1766, 0.0
        %v1908 = vadd.f32 %v1906, %v1907
        %v1909 = vsel %vm1071, %v1767, 0.0
        %v1910 = vadd.f32 %v1908, %v1909
        %v1911 = vsel %vm1071, %v1768, 0.0
        %v1912 = vadd.f32 %v1910, %v1911
        %v1913 = vsel %vm1071, %v1769, 0.0
        %v1914 = vadd.f32 %v1912, %v1913
        %v1915 = vsel %vm1071, %v1770, 0.0
        %v1916 = vadd.f32 %v1914, %v1915
        %v1917 = vsel %vm1071, %v1771, 0.0
        %v1918 = vadd.f32 %v1916, %v1917
        %v1919 = vsel %vm1071, %v1772, 0.0
        %v1920 = vadd.f32 %v1918, %v1919
        %v1921 = vsel %vm1071, %v1773, 0.0
        %v1922 = vadd.f32 %v1920, %v1921
        %v1923 = vsel %vm1071, %v1774, 0.0
        %v1924 = vadd.f32 %v1922, %v1923
        %v1925 = vsel %vm1071, %v1775, 0.0
        %v1926 = vadd.f32 %v1924, %v1925
        %v1927 = vsel %vm1071, %v1776, 0.0
        %v1928 = vadd.f32 %v1926, %v1927
        %v1929 = vsel %vm1071, %v1777, 0.0
        %v1930 = vadd.f32 %v1928, %v1929
        %v1931 = vrot.slane %v1930, 4
        %v1932 = vadd.f32 %v1930, %v1931
        %v1933 = vrot.slane %v1932, 2
        %v1934 = vadd.f32 %v1932, %v1933
        %v1935 = vrot.slane %v1934, 1
        %v1936 = vadd.f32 %v1934, %v1935
        %v1937 = vadd.f32 %v1899, %v1936
        %vm1938 = vcmask 57344
        %1939 = vst.msk [vmem:[%s277] sm:$0x1] %vm1938, %v1937
        %s1940 = smul.u32 16, %s31
        %p1941 = scmp.lt.s32.totalorder %s30, 1
        %s1942 = scalar_select %p1941, %s30, 1
        %p1943 = scmp.lt.s32.totalorder %s1940, 31
        %s1944 = scalar_select %p1943, %s1940, 31
        %s1945 = smul.addr %s1942, 32
        %s1946 = sadd.s32 %s1944, %s1945
        %s1947 = smul.addr %s1946, 8
        %s1948 = scalar_lea.vmem %s3, %s1947
        %s1949 = sand.u32 %s142, 1
        %s1950 = scalar_lea.sflag [#allocation7], %s1949
        %s1951 = sand.u32 %s142, 1
        %s1952 = smul.addr %s1951, 8
        %s1953 = scalar_lea.vmem [#allocation8], %s1952
        %s1954 = sand.u32 %s168, 1
        %s1955 = scalar_lea.sflag [#allocation10], %s1954
        %s1956 = sand.u32 %s168, 1
        %s1957 = scalar_lea.vmem [#allocation9], %s1956
        // Predicated region
        $region41: #{tpu_custom_call.1} parent=31 // pred_check
          %p1958 = pneg %p126
        $region42: #{tpu_custom_call.1} parent=31 // pred_check_branch
          %1960 = sbr.rel (%p1958) target = $region44
        $region43: #{tpu_custom_call.1} parent=31 // pred_region
          %s1961 = smul.u32 16, %s31
        $region44: #{tpu_custom_call.1} parent=31 // pred_fallthru
          _
        // Predicated region
        $region45: #{tpu_custom_call.1} parent=31 // pred_check
          %p1962 = pneg %p152
        $region46: #{tpu_custom_call.1} parent=31 // pred_check_branch
          %1964 = sbr.rel (%p1962) target = $region48
        $region47: #{tpu_custom_call.1} parent=31 // pred_region
          %s1966 = ssub.s32 128, 128
          %1967 = vsyncadd %s1950, %s1966
          %s1968 = smul.addr %s30, 128
          %s1969 = scalar_lea.hbm %s4, %s1968
          %s1971 = sshll.u32 %s1953, 4
          %s1972 = int_to_ptr.vmem [resolvable:$true] %s1971
          %1974 = dma.vmem_to_hbm [thread:$0]  %s1972, 128, %s1969, %s1950
        $region48: #{tpu_custom_call.1} parent=31 // pred_fallthru
          _
        // Predicated region
        $region49: #{tpu_custom_call.1} parent=31 // pred_check
          %p1975 = pneg %p178
        $region50: #{tpu_custom_call.1} parent=31 // pred_check_branch
          %1977 = sbr.rel (%p1975) target = $region52
        $region51: #{tpu_custom_call.1} parent=31 // pred_region
          %s1979 = ssub.s32 16, 16
          %1980 = vsyncadd %s1955, %s1979
          %s1981 = smul.addr %s30, 16
          %s1982 = scalar_lea.hbm %s5, %s1981
          %s1984 = sshll.u32 %s1957, 4
          %s1985 = int_to_ptr.vmem [resolvable:$true] %s1984
          %1987 = dma.vmem_to_hbm [thread:$0]  %s1985, 16, %s1982, %s1955
        $region52: #{tpu_custom_call.1} parent=31 // pred_fallthru
          _
      $region32: #{tpu_custom_call.1} parent=5 // pred_fallthru
        _
      %p1988 = scmp.le.s32.totalorder 2, %s21
      // Predicated region
      $region53: #{tpu_custom_call.1} parent=5 // pred_check
        %p1989 = pneg %p1988
      $region54: #{tpu_custom_call.1} parent=5 // pred_check_branch
        %1991 = sbr.rel (%p1989) target = $region56
      $region55: #{tpu_custom_call.1} parent=5 // pred_region
        %s1992 = ssub.s32 %s21, 2
        // Predicated region
        $region57: #{tpu_custom_call.1} parent=55 // pred_check
          %p1993 = pneg %p132
        $region58: #{tpu_custom_call.1} parent=55 // pred_check_branch
          %1995 = sbr.rel (%p1993) target = $region60
        $region59: #{tpu_custom_call.1} parent=55 // pred_region
          %s1996 = smul.u32 16, %s33
          %p1997 = scmp.lt.s32.totalorder %s32, 1
          %s1998 = scalar_select %p1997, %s32, 1
          %p1999 = scmp.lt.s32.totalorder %s1996, 31
          %s2000 = scalar_select %p1999, %s1996, 31
          %s2001 = smul.addr %s1998, 32
          %s2002 = sadd.s32 %s2000, %s2001
          %s2003 = smul.addr %s2002, 8
          %s2004 = scalar_lea.vmem %s3, %s2003
        $region60: #{tpu_custom_call.1} parent=55 // pred_fallthru
          _
        // Predicated region
        $region61: #{tpu_custom_call.1} parent=55 // pred_check
          %p2005 = pneg %p158
        $region62: #{tpu_custom_call.1} parent=55 // pred_check_branch
          %2007 = sbr.rel (%p2005) target = $region64
        $region63: #{tpu_custom_call.1} parent=55 // pred_region
          %s2008 = sand.u32 %s143, 1
          %s2009 = scalar_lea.sflag [#allocation7], %s2008
          %s2010 = sand.u32 %s143, 1
          %s2011 = smul.addr %s2010, 8
          %s2012 = scalar_lea.vmem [#allocation8], %s2011
          %2013 = dma.done %s2009, 128
        $region64: #{tpu_custom_call.1} parent=55 // pred_fallthru
          _
        // Predicated region
        $region65: #{tpu_custom_call.1} parent=55 // pred_check
          %p2014 = pneg %p184
        $region66: #{tpu_custom_call.1} parent=55 // pred_check_branch
          %2016 = sbr.rel (%p2014) target = $region68
        $region67: #{tpu_custom_call.1} parent=55 // pred_region
          %s2017 = sand.u32 %s169, 1
          %s2018 = scalar_lea.sflag [#allocation10], %s2017
          %s2019 = sand.u32 %s169, 1
          %s2020 = scalar_lea.vmem [#allocation9], %s2019
          %2021 = dma.done %s2018, 16
        $region68: #{tpu_custom_call.1} parent=55 // pred_fallthru
          _
      $region56: #{tpu_custom_call.1} parent=5 // pred_fallthru
        _
    $region6: #{tpu_custom_call.1} parent=1 // loop_footer
      %s25 = sadd.s32 1, %s21
    $region7: #{tpu_custom_call.1} parent=1 // loop_footer_branch
      %20 = sbr.rel target = $region3
    $region8: #{tpu_custom_call.1} parent=1 // loop_exit
      _
    %2022 = vsyncpa [#allocation6], 1
    %s2023 = scalar_lea.sflag [#allocation6], 1
    %2024 = vsyncpa %s2023, 1
    %2025 = vsyncpa [#allocation7], 1
    %s2026 = scalar_lea.sflag [#allocation7], 1
    %2027 = vsyncpa %s2026, 1
    %2028 = vsyncpa [#allocation10], 1
    %s2029 = scalar_lea.sflag [#allocation10], 1
    %2030 = vsyncpa %s2029, 1

</llo_original>
